<compile_context>
chip_gen: v7x
topology: tpu7x:2x2x1
jax: 0.10.0
libtpu: 0.0.40
codegen_flags: <defaults>
</compile_context>

<pallas_src>
import functools

import jax
import jax.numpy as jnp
from jax.experimental import pallas as pl
from jax.experimental.pallas import tpu as pltpu


def _cbam_kernel(x_ref, w1t_ref, w2_ref, b2_ref, mask_ref, cw_ref,
                 b1_ref, cb_ref, o_ref, *, C, H, W, mid):
    HW = H * W
    PAD = 3 * W + 3        # flat padding covering any (dy, dx) in [-3, 3]^2

    x2 = x_ref[...].astype(jnp.float32)                         # (C, HW) lane-dense

    # ---- Channel attention: global avg / max pool over spatial dims --------
    avg = jnp.mean(x2, axis=1, keepdims=True)                   # (C, 1)
    mx = jnp.max(x2, axis=1, keepdims=True)                     # (C, 1)
    pooled = jnp.concatenate([avg, mx], axis=1)                 # (C, 2)

    # Shared MLP on the VPU/XLU (mid = C // 16 is tiny, unroll over it).
    w1t = w1t_ref[...]                                          # (C, mid) = W1^T
    w2v = w2_ref[...]                                           # (C, mid) = W2
    acc_o = jnp.zeros((C, 2), jnp.float32)
    for m in range(mid):
        # layer 1, hidden unit m, both pooled paths at once: (1, 2)
        h_m = jnp.sum(w1t[:, m:m + 1] * pooled, axis=0, keepdims=True)
        h_m = jnp.maximum(h_m + b1_ref[m], 0.0)
        # layer 2 contribution of unit m: (C, 1) * (1, 2) -> (C, 2)
        acc_o = acc_o + w2v[:, m:m + 1] * h_m
    o_mlp = acc_o + b2_ref[...]                                 # (C, 2)
    ca = jax.nn.sigmoid(o_mlp[:, 0:1] + o_mlp[:, 1:2])          # (C, 1)

    y2 = x2 * ca                                                # (C, HW)

    # ---- Spatial attention: channel mean/max, 7x7 conv (pad=3), sigmoid ----
    sa_avg = jnp.mean(y2, axis=0, keepdims=True)                # (1, HW)
    sa_max = jnp.max(y2, axis=0, keepdims=True)                 # (1, HW)
    sa = jnp.concatenate([sa_avg, sa_max], axis=0)              # (2, HW)

    zpad = jnp.zeros((2, PAD), jnp.float32)
    padded = jnp.concatenate([zpad, sa, zpad], axis=1)          # (2, HW + 2*PAD)
    mask = mask_ref[...]                                        # (7, HW), 0/1 floats
    cw = cw_ref[...]                                            # (2, 49) conv weights

    # Flattened 2-D conv: a (dy, dx) tap is a flat shift by dy*W + dx into the
    # zero-padded rows; column wrap-around is killed by the per-dx mask (which
    # factors out of the sum over channel and dy).  Both input channels are
    # processed together in the (2, HW) slab.
    acc = jnp.zeros((2, HW), jnp.float32)
    for dx in range(-3, 4):
        part = jnp.zeros((2, HW), jnp.float32)
        for dy in range(-3, 4):
            tap = (dy + 3) * 7 + (dx + 3)
            start = PAD + dy * W + dx
            part = part + cw[:, tap:tap + 1] * padded[:, start:start + HW]
        acc = acc + mask[dx + 3:dx + 4, :] * part
    s = jax.nn.sigmoid(acc[0:1, :] + acc[1:2, :] + cb_ref[0])   # (1, HW)

    o_ref[...] = (y2 * s).astype(o_ref.dtype)


def cbam(x, w1, b1, w2, b2, conv_w, conv_b):
    B, C, H, W = x.shape
    HW = H * W
    mid = w1.shape[0]

    x_flat = x.reshape(B, C, HW)                                # lane-dense layout

    # Per-column-offset validity mask for the flattened 7-wide conv window.
    cols = jnp.arange(HW, dtype=jnp.int32) % W
    offs = jnp.arange(-3, 4, dtype=jnp.int32)
    shifted = cols[None, :] + offs[:, None]
    col_mask = ((shifted >= 0) & (shifted < W)).astype(jnp.float32)   # (7, HW)

    kernel = functools.partial(_cbam_kernel, C=C, H=H, W=W, mid=mid)

    out_flat = pl.pallas_call(
        kernel,
        out_shape=jax.ShapeDtypeStruct((B, C, HW), x.dtype),
        grid_spec=pltpu.PrefetchScalarGridSpec(
            num_scalar_prefetch=0,
            grid=(B,),
            in_specs=[
                pl.BlockSpec((None, C, HW), lambda b: (b, 0, 0)),      # x (flat)
                pl.BlockSpec((C, mid), lambda b: (0, 0)),              # W1^T
                pl.BlockSpec((C, mid), lambda b: (0, 0)),              # W2
                pl.BlockSpec((C, 1), lambda b: (0, 0)),                # b2
                pl.BlockSpec((7, HW), lambda b: (0, 0)),               # column mask
                pl.BlockSpec((2, 49), lambda b: (0, 0)),               # conv w (2,49)
                pl.BlockSpec(memory_space=pltpu.MemorySpace.SMEM),     # b1
                pl.BlockSpec(memory_space=pltpu.MemorySpace.SMEM),     # conv b
            ],
            out_specs=pl.BlockSpec((None, C, HW), lambda b: (b, 0, 0)),
        ),
        compiler_params=pltpu.CompilerParams(
            dimension_semantics=("parallel",)),
    )(x_flat, w1.T, w2, b2.reshape(C, 1), col_mask,
      conv_w.reshape(2, 49), b1, conv_b)

    return out_flat.reshape(B, C, H, W)


def cbam_ref(x, w1, b1, w2, b2, conv_w, conv_b):
    """Pure-JAX reference matching the PyTorch forward."""
    avg = x.mean(axis=(2, 3))
    mx = x.max(axis=(2, 3))
    mlp = lambda v: jnp.maximum(v @ w1.T + b1, 0.0) @ w2.T + b2
    ca = jax.nn.sigmoid(mlp(avg) + mlp(mx))
    y = x * ca[:, :, None, None]
    sa_in = jnp.stack([y.mean(axis=1), y.max(axis=1)], axis=1)
    conv = jax.lax.conv_general_dilated(
        sa_in, conv_w, (1, 1), [(3, 3), (3, 3)],
        dimension_numbers=("NCHW", "OIHW", "NCHW")) + conv_b.reshape(1, 1, 1, 1)
    return y * jax.nn.sigmoid(conv)


if __name__ == "__main__":
    # c1 = 32 so that c1 // reduction(=16) = 2 (a valid hidden width).
    B, C, H, W = 2, 32, 16, 16
    mid = C // 16

    keys = jax.random.split(jax.random.PRNGKey(0), 7)
    x = jax.random.normal(keys[0], (B, C, H, W), jnp.float32)
    w1 = 0.3 * jax.random.normal(keys[1], (mid, C), jnp.float32)   # Linear(C->mid)
    b1 = 0.1 * jax.random.normal(keys[2], (mid,), jnp.float32)
    w2 = 0.3 * jax.random.normal(keys[3], (C, mid), jnp.float32)   # Linear(mid->C)
    b2 = 0.1 * jax.random.normal(keys[4], (C,), jnp.float32)
    conv_w = 0.1 * jax.random.normal(keys[5], (1, 2, 7, 7), jnp.float32)
    conv_b = 0.1 * jax.random.normal(keys[6], (1,), jnp.float32)

    out = cbam(x, w1, b1, w2, b2, conv_w, conv_b)
    out = jax.block_until_ready(out)

    ref = cbam_ref(x, w1, b1, w2, b2, conv_w, conv_b)
    assert out.shape == (B, C, H, W)
    assert jnp.allclose(out, ref, atol=1e-4, rtol=1e-4), float(
        jnp.max(jnp.abs(out - ref)))

    print("KERNEL_OK")
</pallas_src>

<mosaic_0001>
module attributes {stable_mosaic.version = 11 : i64} {
  func.func @_cbam_kernel(%arg0: i32, %arg1: memref<1x32x256xf32, #tpu.memory_space<vmem>>, %arg2: memref<32x2xf32, #tpu.memory_space<vmem>>, %arg3: memref<32x2xf32, #tpu.memory_space<vmem>>, %arg4: memref<32x1xf32, #tpu.memory_space<vmem>>, %arg5: memref<7x256xf32, #tpu.memory_space<vmem>>, %arg6: memref<2x49xf32, #tpu.memory_space<vmem>>, %arg7: memref<2xf32, #tpu.memory_space<smem>>, %arg8: memref<1xf32, #tpu.memory_space<smem>>, %arg9: memref<1x32x256xf32, #tpu.memory_space<vmem>>) attributes {dimension_semantics = [#tpu.dimension_semantics<parallel>], iteration_bounds = array<i64: 2>, scalar_prefetch = 0 : i64, scratch_operands = 0 : i64, tpu.core_type = #tpu.core_type<tc>, window_params = [{transform_indices = @transform_0, window_bounds = array<i64: 1, 32, 256>}, {pipeline_mode = #tpu.pipeline_mode<synchronous>, transform_indices = @transform_1, window_bounds = array<i64: 32, 2>}, {pipeline_mode = #tpu.pipeline_mode<synchronous>, transform_indices = @transform_2, window_bounds = array<i64: 32, 2>}, {pipeline_mode = #tpu.pipeline_mode<synchronous>, transform_indices = @transform_3, window_bounds = array<i64: 32, 1>}, {pipeline_mode = #tpu.pipeline_mode<synchronous>, transform_indices = @transform_4, window_bounds = array<i64: 7, 256>}, {pipeline_mode = #tpu.pipeline_mode<synchronous>, transform_indices = @transform_5, window_bounds = array<i64: 2, 49>}, {transform_indices = @transform_6, window_bounds = array<i64: 2>}, {transform_indices = @transform_7, window_bounds = array<i64: 1>}, {transform_indices = @transform_8, window_bounds = array<i64: 1, 32, 256>}]} {
    %c0 = arith.constant 0 : index
    %c0_0 = arith.constant 0 : index
    %c0_1 = arith.constant 0 : index
    %0 = vector.load %arg1[%c0, %c0_0, %c0_1] : memref<1x32x256xf32, #tpu.memory_space<vmem>>, vector<1x32x256xf32>
    %1 = vector.shape_cast %0 : vector<1x32x256xf32> to vector<32x256xf32>
    %cst = arith.constant dense<0.000000e+00> : vector<32xf32>
    %2 = vector.multi_reduction <add>, %1, %cst [1] : vector<32x256xf32> to vector<32xf32>
    %3 = vector.shape_cast %2 : vector<32xf32> to vector<32x1xf32>
    %cst_2 = arith.constant 2.560000e+02 : f32
    %4 = vector.broadcast %cst_2 : f32 to vector<32x1xf32>
    %5 = arith.divf %3, %4 : vector<32x1xf32>
    %cst_3 = arith.constant dense<0xFF800000> : vector<32xf32>
    %6 = vector.multi_reduction <maximumf>, %1, %cst_3 [1] : vector<32x256xf32> to vector<32xf32>
    %7 = vector.shape_cast %6 : vector<32xf32> to vector<32x1xf32>
    %8 = tpu.concatenate %5, %7 in 1 : vector<32x1xf32>, vector<32x1xf32> -> vector<32x2xf32>
    %c0_4 = arith.constant 0 : index
    %c0_5 = arith.constant 0 : index
    %9 = vector.load %arg2[%c0_4, %c0_5] : memref<32x2xf32, #tpu.memory_space<vmem>>, vector<32x2xf32>
    %c0_6 = arith.constant 0 : index
    %c0_7 = arith.constant 0 : index
    %10 = vector.load %arg3[%c0_6, %c0_7] : memref<32x2xf32, #tpu.memory_space<vmem>>, vector<32x2xf32>
    %cst_8 = arith.constant 0.000000e+00 : f32
    %11 = vector.broadcast %cst_8 : f32 to vector<32x2xf32>
    %12 = vector.extract_strided_slice %9 {offsets = [0, 0], sizes = [32, 1], strides = [1, 1]} : vector<32x2xf32> to vector<32x1xf32>
    %13 = vector.broadcast %12 : vector<32x1xf32> to vector<32x2xf32>
    %14 = arith.mulf %13, %8 : vector<32x2xf32>
    %cst_9 = arith.constant dense<0.000000e+00> : vector<2xf32>
    %15 = vector.multi_reduction <add>, %14, %cst_9 [0] : vector<32x2xf32> to vector<2xf32>
    %16 = vector.shape_cast %15 : vector<2xf32> to vector<1x2xf32>
    %c0_10 = arith.constant 0 : index
    %17 = memref.load %arg7[%c0_10] : memref<2xf32, #tpu.memory_space<smem>>
    %18 = vector.broadcast %17 : f32 to vector<1x2xf32>
    %19 = arith.addf %16, %18 : vector<1x2xf32>
    %cst_11 = arith.constant 0.000000e+00 : f32
    %20 = vector.broadcast %cst_11 : f32 to vector<1x2xf32>
    %21 = arith.maximumf %19, %20 : vector<1x2xf32>
    %22 = vector.extract_strided_slice %10 {offsets = [0, 0], sizes = [32, 1], strides = [1, 1]} : vector<32x2xf32> to vector<32x1xf32>
    %23 = vector.broadcast %22 : vector<32x1xf32> to vector<32x2xf32>
    %24 = vector.broadcast %21 : vector<1x2xf32> to vector<32x2xf32>
    %25 = arith.mulf %23, %24 : vector<32x2xf32>
    %26 = arith.addf %11, %25 : vector<32x2xf32>
    %27 = vector.extract_strided_slice %9 {offsets = [0, 1], sizes = [32, 1], strides = [1, 1]} : vector<32x2xf32> to vector<32x1xf32>
    %28 = vector.broadcast %27 : vector<32x1xf32> to vector<32x2xf32>
    %29 = arith.mulf %28, %8 : vector<32x2xf32>
    %cst_12 = arith.constant dense<0.000000e+00> : vector<2xf32>
    %30 = vector.multi_reduction <add>, %29, %cst_12 [0] : vector<32x2xf32> to vector<2xf32>
    %31 = vector.shape_cast %30 : vector<2xf32> to vector<1x2xf32>
    %c1 = arith.constant 1 : index
    %32 = memref.load %arg7[%c1] : memref<2xf32, #tpu.memory_space<smem>>
    %33 = vector.broadcast %32 : f32 to vector<1x2xf32>
    %34 = arith.addf %31, %33 : vector<1x2xf32>
    %cst_13 = arith.constant 0.000000e+00 : f32
    %35 = vector.broadcast %cst_13 : f32 to vector<1x2xf32>
    %36 = arith.maximumf %34, %35 : vector<1x2xf32>
    %37 = vector.extract_strided_slice %10 {offsets = [0, 1], sizes = [32, 1], strides = [1, 1]} : vector<32x2xf32> to vector<32x1xf32>
    %38 = vector.broadcast %37 : vector<32x1xf32> to vector<32x2xf32>
    %39 = vector.broadcast %36 : vector<1x2xf32> to vector<32x2xf32>
    %40 = arith.mulf %38, %39 : vector<32x2xf32>
    %41 = arith.addf %26, %40 : vector<32x2xf32>
    %c0_14 = arith.constant 0 : index
    %c0_15 = arith.constant 0 : index
    %42 = vector.load %arg4[%c0_14, %c0_15] : memref<32x1xf32, #tpu.memory_space<vmem>>, vector<32x1xf32>
    %43 = vector.broadcast %42 : vector<32x1xf32> to vector<32x2xf32>
    %44 = arith.addf %41, %43 : vector<32x2xf32>
    %45 = vector.extract_strided_slice %44 {offsets = [0, 0], sizes = [32, 1], strides = [1, 1]} : vector<32x2xf32> to vector<32x1xf32>
    %46 = vector.extract_strided_slice %44 {offsets = [0, 1], sizes = [32, 1], strides = [1, 1]} : vector<32x2xf32> to vector<32x1xf32>
    %47 = arith.addf %45, %46 : vector<32x1xf32>
    %48 = arith.negf %47 : vector<32x1xf32>
    %49 = math.exp %48 : vector<32x1xf32>
    %cst_16 = arith.constant 1.000000e+00 : f32
    %50 = vector.broadcast %cst_16 : f32 to vector<32x1xf32>
    %51 = arith.addf %50, %49 : vector<32x1xf32>
    %52 = arith.divf %50, %51 : vector<32x1xf32>
    %53 = vector.broadcast %52 : vector<32x1xf32> to vector<32x256xf32>
    %54 = arith.mulf %1, %53 : vector<32x256xf32>
    %cst_17 = arith.constant dense<0.000000e+00> : vector<256xf32>
    %55 = vector.multi_reduction <add>, %54, %cst_17 [0] : vector<32x256xf32> to vector<256xf32>
    %56 = vector.shape_cast %55 : vector<256xf32> to vector<1x256xf32>
    %cst_18 = arith.constant 3.200000e+01 : f32
    %57 = vector.broadcast %cst_18 : f32 to vector<1x256xf32>
    %58 = arith.divf %56, %57 : vector<1x256xf32>
    %cst_19 = arith.constant dense<0xFF800000> : vector<256xf32>
    %59 = vector.multi_reduction <maximumf>, %54, %cst_19 [0] : vector<32x256xf32> to vector<256xf32>
    %60 = vector.shape_cast %59 : vector<256xf32> to vector<1x256xf32>
    %61 = tpu.concatenate %58, %60 in 0 : vector<1x256xf32>, vector<1x256xf32> -> vector<2x256xf32>
    %cst_20 = arith.constant 0.000000e+00 : f32
    %62 = vector.broadcast %cst_20 : f32 to vector<2x51xf32>
    %63 = tpu.concatenate %62, %61, %62 in 1 : vector<2x51xf32>, vector<2x256xf32>, vector<2x51xf32> -> vector<2x358xf32>
    %c0_21 = arith.constant 0 : index
    %c0_22 = arith.constant 0 : index
    %64 = vector.load %arg5[%c0_21, %c0_22] : memref<7x256xf32, #tpu.memory_space<vmem>>, vector<7x256xf32>
    %c0_23 = arith.constant 0 : index
    %c0_24 = arith.constant 0 : index
    %65 = vector.load %arg6[%c0_23, %c0_24] : memref<2x49xf32, #tpu.memory_space<vmem>>, vector<2x49xf32>
    %cst_25 = arith.constant 0.000000e+00 : f32
    %66 = vector.broadcast %cst_25 : f32 to vector<2x256xf32>
    %cst_26 = arith.constant 0.000000e+00 : f32
    %67 = vector.broadcast %cst_26 : f32 to vector<2x256xf32>
    %68 = vector.extract_strided_slice %65 {offsets = [0, 0], sizes = [2, 1], strides = [1, 1]} : vector<2x49xf32> to vector<2x1xf32>
    %69 = vector.extract_strided_slice %63 {offsets = [0, 0], sizes = [2, 256], strides = [1, 1]} : vector<2x358xf32> to vector<2x256xf32>
    %70 = vector.broadcast %68 : vector<2x1xf32> to vector<2x256xf32>
    %71 = arith.mulf %70, %69 : vector<2x256xf32>
    %72 = arith.addf %67, %71 : vector<2x256xf32>
    %73 = vector.extract_strided_slice %65 {offsets = [0, 7], sizes = [2, 1], strides = [1, 1]} : vector<2x49xf32> to vector<2x1xf32>
    %74 = vector.extract_strided_slice %63 {offsets = [0, 16], sizes = [2, 256], strides = [1, 1]} : vector<2x358xf32> to vector<2x256xf32>
    %75 = vector.broadcast %73 : vector<2x1xf32> to vector<2x256xf32>
    %76 = arith.mulf %75, %74 : vector<2x256xf32>
    %77 = arith.addf %72, %76 : vector<2x256xf32>
    %78 = vector.extract_strided_slice %65 {offsets = [0, 14], sizes = [2, 1], strides = [1, 1]} : vector<2x49xf32> to vector<2x1xf32>
    %79 = vector.extract_strided_slice %63 {offsets = [0, 32], sizes = [2, 256], strides = [1, 1]} : vector<2x358xf32> to vector<2x256xf32>
    %80 = vector.broadcast %78 : vector<2x1xf32> to vector<2x256xf32>
    %81 = arith.mulf %80, %79 : vector<2x256xf32>
    %82 = arith.addf %77, %81 : vector<2x256xf32>
    %83 = vector.extract_strided_slice %65 {offsets = [0, 21], sizes = [2, 1], strides = [1, 1]} : vector<2x49xf32> to vector<2x1xf32>
    %84 = vector.extract_strided_slice %63 {offsets = [0, 48], sizes = [2, 256], strides = [1, 1]} : vector<2x358xf32> to vector<2x256xf32>
    %85 = vector.broadcast %83 : vector<2x1xf32> to vector<2x256xf32>
    %86 = arith.mulf %85, %84 : vector<2x256xf32>
    %87 = arith.addf %82, %86 : vector<2x256xf32>
    %88 = vector.extract_strided_slice %65 {offsets = [0, 28], sizes = [2, 1], strides = [1, 1]} : vector<2x49xf32> to vector<2x1xf32>
    %89 = vector.extract_strided_slice %63 {offsets = [0, 64], sizes = [2, 256], strides = [1, 1]} : vector<2x358xf32> to vector<2x256xf32>
    %90 = vector.broadcast %88 : vector<2x1xf32> to vector<2x256xf32>
    %91 = arith.mulf %90, %89 : vector<2x256xf32>
    %92 = arith.addf %87, %91 : vector<2x256xf32>
    %93 = vector.extract_strided_slice %65 {offsets = [0, 35], sizes = [2, 1], strides = [1, 1]} : vector<2x49xf32> to vector<2x1xf32>
    %94 = vector.extract_strided_slice %63 {offsets = [0, 80], sizes = [2, 256], strides = [1, 1]} : vector<2x358xf32> to vector<2x256xf32>
    %95 = vector.broadcast %93 : vector<2x1xf32> to vector<2x256xf32>
    %96 = arith.mulf %95, %94 : vector<2x256xf32>
    %97 = arith.addf %92, %96 : vector<2x256xf32>
    %98 = vector.extract_strided_slice %65 {offsets = [0, 42], sizes = [2, 1], strides = [1, 1]} : vector<2x49xf32> to vector<2x1xf32>
    %99 = vector.extract_strided_slice %63 {offsets = [0, 96], sizes = [2, 256], strides = [1, 1]} : vector<2x358xf32> to vector<2x256xf32>
    %100 = vector.broadcast %98 : vector<2x1xf32> to vector<2x256xf32>
    %101 = arith.mulf %100, %99 : vector<2x256xf32>
    %102 = arith.addf %97, %101 : vector<2x256xf32>
    %103 = vector.extract_strided_slice %64 {offsets = [0, 0], sizes = [1, 256], strides = [1, 1]} : vector<7x256xf32> to vector<1x256xf32>
    %104 = vector.broadcast %103 : vector<1x256xf32> to vector<2x256xf32>
    %105 = arith.mulf %104, %102 : vector<2x256xf32>
    %106 = arith.addf %66, %105 : vector<2x256xf32>
    %cst_27 = arith.constant 0.000000e+00 : f32
    %107 = vector.broadcast %cst_27 : f32 to vector<2x256xf32>
    %108 = vector.extract_strided_slice %65 {offsets = [0, 1], sizes = [2, 1], strides = [1, 1]} : vector<2x49xf32> to vector<2x1xf32>
    %109 = vector.extract_strided_slice %63 {offsets = [0, 1], sizes = [2, 256], strides = [1, 1]} : vector<2x358xf32> to vector<2x256xf32>
    %110 = vector.broadcast %108 : vector<2x1xf32> to vector<2x256xf32>
    %111 = arith.mulf %110, %109 : vector<2x256xf32>
    %112 = arith.addf %107, %111 : vector<2x256xf32>
    %113 = vector.extract_strided_slice %65 {offsets = [0, 8], sizes = [2, 1], strides = [1, 1]} : vector<2x49xf32> to vector<2x1xf32>
    %114 = vector.extract_strided_slice %63 {offsets = [0, 17], sizes = [2, 256], strides = [1, 1]} : vector<2x358xf32> to vector<2x256xf32>
    %115 = vector.broadcast %113 : vector<2x1xf32> to vector<2x256xf32>
    %116 = arith.mulf %115, %114 : vector<2x256xf32>
    %117 = arith.addf %112, %116 : vector<2x256xf32>
    %118 = vector.extract_strided_slice %65 {offsets = [0, 15], sizes = [2, 1], strides = [1, 1]} : vector<2x49xf32> to vector<2x1xf32>
    %119 = vector.extract_strided_slice %63 {offsets = [0, 33], sizes = [2, 256], strides = [1, 1]} : vector<2x358xf32> to vector<2x256xf32>
    %120 = vector.broadcast %118 : vector<2x1xf32> to vector<2x256xf32>
    %121 = arith.mulf %120, %119 : vector<2x256xf32>
    %122 = arith.addf %117, %121 : vector<2x256xf32>
    %123 = vector.extract_strided_slice %65 {offsets = [0, 22], sizes = [2, 1], strides = [1, 1]} : vector<2x49xf32> to vector<2x1xf32>
    %124 = vector.extract_strided_slice %63 {offsets = [0, 49], sizes = [2, 256], strides = [1, 1]} : vector<2x358xf32> to vector<2x256xf32>
    %125 = vector.broadcast %123 : vector<2x1xf32> to vector<2x256xf32>
    %126 = arith.mulf %125, %124 : vector<2x256xf32>
    %127 = arith.addf %122, %126 : vector<2x256xf32>
    %128 = vector.extract_strided_slice %65 {offsets = [0, 29], sizes = [2, 1], strides = [1, 1]} : vector<2x49xf32> to vector<2x1xf32>
    %129 = vector.extract_strided_slice %63 {offsets = [0, 65], sizes = [2, 256], strides = [1, 1]} : vector<2x358xf32> to vector<2x256xf32>
    %130 = vector.broadcast %128 : vector<2x1xf32> to vector<2x256xf32>
    %131 = arith.mulf %130, %129 : vector<2x256xf32>
    %132 = arith.addf %127, %131 : vector<2x256xf32>
    %133 = vector.extract_strided_slice %65 {offsets = [0, 36], sizes = [2, 1], strides = [1, 1]} : vector<2x49xf32> to vector<2x1xf32>
    %134 = vector.extract_strided_slice %63 {offsets = [0, 81], sizes = [2, 256], strides = [1, 1]} : vector<2x358xf32> to vector<2x256xf32>
    %135 = vector.broadcast %133 : vector<2x1xf32> to vector<2x256xf32>
    %136 = arith.mulf %135, %134 : vector<2x256xf32>
    %137 = arith.addf %132, %136 : vector<2x256xf32>
    %138 = vector.extract_strided_slice %65 {offsets = [0, 43], sizes = [2, 1], strides = [1, 1]} : vector<2x49xf32> to vector<2x1xf32>
    %139 = vector.extract_strided_slice %63 {offsets = [0, 97], sizes = [2, 256], strides = [1, 1]} : vector<2x358xf32> to vector<2x256xf32>
    %140 = vector.broadcast %138 : vector<2x1xf32> to vector<2x256xf32>
    %141 = arith.mulf %140, %139 : vector<2x256xf32>
    %142 = arith.addf %137, %141 : vector<2x256xf32>
    %143 = vector.extract_strided_slice %64 {offsets = [1, 0], sizes = [1, 256], strides = [1, 1]} : vector<7x256xf32> to vector<1x256xf32>
    %144 = vector.broadcast %143 : vector<1x256xf32> to vector<2x256xf32>
    %145 = arith.mulf %144, %142 : vector<2x256xf32>
    %146 = arith.addf %106, %145 : vector<2x256xf32>
    %cst_28 = arith.constant 0.000000e+00 : f32
    %147 = vector.broadcast %cst_28 : f32 to vector<2x256xf32>
    %148 = vector.extract_strided_slice %65 {offsets = [0, 2], sizes = [2, 1], strides = [1, 1]} : vector<2x49xf32> to vector<2x1xf32>
    %149 = vector.extract_strided_slice %63 {offsets = [0, 2], sizes = [2, 256], strides = [1, 1]} : vector<2x358xf32> to vector<2x256xf32>
    %150 = vector.broadcast %148 : vector<2x1xf32> to vector<2x256xf32>
    %151 = arith.mulf %150, %149 : vector<2x256xf32>
    %152 = arith.addf %147, %151 : vector<2x256xf32>
    %153 = vector.extract_strided_slice %65 {offsets = [0, 9], sizes = [2, 1], strides = [1, 1]} : vector<2x49xf32> to vector<2x1xf32>
    %154 = vector.extract_strided_slice %63 {offsets = [0, 18], sizes = [2, 256], strides = [1, 1]} : vector<2x358xf32> to vector<2x256xf32>
    %155 = vector.broadcast %153 : vector<2x1xf32> to vector<2x256xf32>
    %156 = arith.mulf %155, %154 : vector<2x256xf32>
    %157 = arith.addf %152, %156 : vector<2x256xf32>
    %158 = vector.extract_strided_slice %65 {offsets = [0, 16], sizes = [2, 1], strides = [1, 1]} : vector<2x49xf32> to vector<2x1xf32>
    %159 = vector.extract_strided_slice %63 {offsets = [0, 34], sizes = [2, 256], strides = [1, 1]} : vector<2x358xf32> to vector<2x256xf32>
    %160 = vector.broadcast %158 : vector<2x1xf32> to vector<2x256xf32>
    %161 = arith.mulf %160, %159 : vector<2x256xf32>
    %162 = arith.addf %157, %161 : vector<2x256xf32>
    %163 = vector.extract_strided_slice %65 {offsets = [0, 23], sizes = [2, 1], strides = [1, 1]} : vector<2x49xf32> to vector<2x1xf32>
    %164 = vector.extract_strided_slice %63 {offsets = [0, 50], sizes = [2, 256], strides = [1, 1]} : vector<2x358xf32> to vector<2x256xf32>
    %165 = vector.broadcast %163 : vector<2x1xf32> to vector<2x256xf32>
    %166 = arith.mulf %165, %164 : vector<2x256xf32>
    %167 = arith.addf %162, %166 : vector<2x256xf32>
    %168 = vector.extract_strided_slice %65 {offsets = [0, 30], sizes = [2, 1], strides = [1, 1]} : vector<2x49xf32> to vector<2x1xf32>
    %169 = vector.extract_strided_slice %63 {offsets = [0, 66], sizes = [2, 256], strides = [1, 1]} : vector<2x358xf32> to vector<2x256xf32>
    %170 = vector.broadcast %168 : vector<2x1xf32> to vector<2x256xf32>
    %171 = arith.mulf %170, %169 : vector<2x256xf32>
    %172 = arith.addf %167, %171 : vector<2x256xf32>
    %173 = vector.extract_strided_slice %65 {offsets = [0, 37], sizes = [2, 1], strides = [1, 1]} : vector<2x49xf32> to vector<2x1xf32>
    %174 = vector.extract_strided_slice %63 {offsets = [0, 82], sizes = [2, 256], strides = [1, 1]} : vector<2x358xf32> to vector<2x256xf32>
    %175 = vector.broadcast %173 : vector<2x1xf32> to vector<2x256xf32>
    %176 = arith.mulf %175, %174 : vector<2x256xf32>
    %177 = arith.addf %172, %176 : vector<2x256xf32>
    %178 = vector.extract_strided_slice %65 {offsets = [0, 44], sizes = [2, 1], strides = [1, 1]} : vector<2x49xf32> to vector<2x1xf32>
    %179 = vector.extract_strided_slice %63 {offsets = [0, 98], sizes = [2, 256], strides = [1, 1]} : vector<2x358xf32> to vector<2x256xf32>
    %180 = vector.broadcast %178 : vector<2x1xf32> to vector<2x256xf32>
    %181 = arith.mulf %180, %179 : vector<2x256xf32>
    %182 = arith.addf %177, %181 : vector<2x256xf32>
    %183 = vector.extract_strided_slice %64 {offsets = [2, 0], sizes = [1, 256], strides = [1, 1]} : vector<7x256xf32> to vector<1x256xf32>
    %184 = vector.broadcast %183 : vector<1x256xf32> to vector<2x256xf32>
    %185 = arith.mulf %184, %182 : vector<2x256xf32>
    %186 = arith.addf %146, %185 : vector<2x256xf32>
    %cst_29 = arith.constant 0.000000e+00 : f32
    %187 = vector.broadcast %cst_29 : f32 to vector<2x256xf32>
    %188 = vector.extract_strided_slice %65 {offsets = [0, 3], sizes = [2, 1], strides = [1, 1]} : vector<2x49xf32> to vector<2x1xf32>
    %189 = vector.extract_strided_slice %63 {offsets = [0, 3], sizes = [2, 256], strides = [1, 1]} : vector<2x358xf32> to vector<2x256xf32>
    %190 = vector.broadcast %188 : vector<2x1xf32> to vector<2x256xf32>
    %191 = arith.mulf %190, %189 : vector<2x256xf32>
    %192 = arith.addf %187, %191 : vector<2x256xf32>
    %193 = vector.extract_strided_slice %65 {offsets = [0, 10], sizes = [2, 1], strides = [1, 1]} : vector<2x49xf32> to vector<2x1xf32>
    %194 = vector.extract_strided_slice %63 {offsets = [0, 19], sizes = [2, 256], strides = [1, 1]} : vector<2x358xf32> to vector<2x256xf32>
    %195 = vector.broadcast %193 : vector<2x1xf32> to vector<2x256xf32>
    %196 = arith.mulf %195, %194 : vector<2x256xf32>
    %197 = arith.addf %192, %196 : vector<2x256xf32>
    %198 = vector.extract_strided_slice %65 {offsets = [0, 17], sizes = [2, 1], strides = [1, 1]} : vector<2x49xf32> to vector<2x1xf32>
    %199 = vector.extract_strided_slice %63 {offsets = [0, 35], sizes = [2, 256], strides = [1, 1]} : vector<2x358xf32> to vector<2x256xf32>
    %200 = vector.broadcast %198 : vector<2x1xf32> to vector<2x256xf32>
    %201 = arith.mulf %200, %199 : vector<2x256xf32>
    %202 = arith.addf %197, %201 : vector<2x256xf32>
    %203 = vector.extract_strided_slice %65 {offsets = [0, 24], sizes = [2, 1], strides = [1, 1]} : vector<2x49xf32> to vector<2x1xf32>
    %204 = vector.extract_strided_slice %63 {offsets = [0, 51], sizes = [2, 256], strides = [1, 1]} : vector<2x358xf32> to vector<2x256xf32>
    %205 = vector.broadcast %203 : vector<2x1xf32> to vector<2x256xf32>
    %206 = arith.mulf %205, %204 : vector<2x256xf32>
    %207 = arith.addf %202, %206 : vector<2x256xf32>
    %208 = vector.extract_strided_slice %65 {offsets = [0, 31], sizes = [2, 1], strides = [1, 1]} : vector<2x49xf32> to vector<2x1xf32>
    %209 = vector.extract_strided_slice %63 {offsets = [0, 67], sizes = [2, 256], strides = [1, 1]} : vector<2x358xf32> to vector<2x256xf32>
    %210 = vector.broadcast %208 : vector<2x1xf32> to vector<2x256xf32>
    %211 = arith.mulf %210, %209 : vector<2x256xf32>
    %212 = arith.addf %207, %211 : vector<2x256xf32>
    %213 = vector.extract_strided_slice %65 {offsets = [0, 38], sizes = [2, 1], strides = [1, 1]} : vector<2x49xf32> to vector<2x1xf32>
    %214 = vector.extract_strided_slice %63 {offsets = [0, 83], sizes = [2, 256], strides = [1, 1]} : vector<2x358xf32> to vector<2x256xf32>
    %215 = vector.broadcast %213 : vector<2x1xf32> to vector<2x256xf32>
    %216 = arith.mulf %215, %214 : vector<2x256xf32>
    %217 = arith.addf %212, %216 : vector<2x256xf32>
    %218 = vector.extract_strided_slice %65 {offsets = [0, 45], sizes = [2, 1], strides = [1, 1]} : vector<2x49xf32> to vector<2x1xf32>
    %219 = vector.extract_strided_slice %63 {offsets = [0, 99], sizes = [2, 256], strides = [1, 1]} : vector<2x358xf32> to vector<2x256xf32>
    %220 = vector.broadcast %218 : vector<2x1xf32> to vector<2x256xf32>
    %221 = arith.mulf %220, %219 : vector<2x256xf32>
    %222 = arith.addf %217, %221 : vector<2x256xf32>
    %223 = vector.extract_strided_slice %64 {offsets = [3, 0], sizes = [1, 256], strides = [1, 1]} : vector<7x256xf32> to vector<1x256xf32>
    %224 = vector.broadcast %223 : vector<1x256xf32> to vector<2x256xf32>
    %225 = arith.mulf %224, %222 : vector<2x256xf32>
    %226 = arith.addf %186, %225 : vector<2x256xf32>
    %cst_30 = arith.constant 0.000000e+00 : f32
    %227 = vector.broadcast %cst_30 : f32 to vector<2x256xf32>
    %228 = vector.extract_strided_slice %65 {offsets = [0, 4], sizes = [2, 1], strides = [1, 1]} : vector<2x49xf32> to vector<2x1xf32>
    %229 = vector.extract_strided_slice %63 {offsets = [0, 4], sizes = [2, 256], strides = [1, 1]} : vector<2x358xf32> to vector<2x256xf32>
    %230 = vector.broadcast %228 : vector<2x1xf32> to vector<2x256xf32>
    %231 = arith.mulf %230, %229 : vector<2x256xf32>
    %232 = arith.addf %227, %231 : vector<2x256xf32>
    %233 = vector.extract_strided_slice %65 {offsets = [0, 11], sizes = [2, 1], strides = [1, 1]} : vector<2x49xf32> to vector<2x1xf32>
    %234 = vector.extract_strided_slice %63 {offsets = [0, 20], sizes = [2, 256], strides = [1, 1]} : vector<2x358xf32> to vector<2x256xf32>
    %235 = vector.broadcast %233 : vector<2x1xf32> to vector<2x256xf32>
    %236 = arith.mulf %235, %234 : vector<2x256xf32>
    %237 = arith.addf %232, %236 : vector<2x256xf32>
    %238 = vector.extract_strided_slice %65 {offsets = [0, 18], sizes = [2, 1], strides = [1, 1]} : vector<2x49xf32> to vector<2x1xf32>
    %239 = vector.extract_strided_slice %63 {offsets = [0, 36], sizes = [2, 256], strides = [1, 1]} : vector<2x358xf32> to vector<2x256xf32>
    %240 = vector.broadcast %238 : vector<2x1xf32> to vector<2x256xf32>
    %241 = arith.mulf %240, %239 : vector<2x256xf32>
    %242 = arith.addf %237, %241 : vector<2x256xf32>
    %243 = vector.extract_strided_slice %65 {offsets = [0, 25], sizes = [2, 1], strides = [1, 1]} : vector<2x49xf32> to vector<2x1xf32>
    %244 = vector.extract_strided_slice %63 {offsets = [0, 52], sizes = [2, 256], strides = [1, 1]} : vector<2x358xf32> to vector<2x256xf32>
    %245 = vector.broadcast %243 : vector<2x1xf32> to vector<2x256xf32>
    %246 = arith.mulf %245, %244 : vector<2x256xf32>
    %247 = arith.addf %242, %246 : vector<2x256xf32>
    %248 = vector.extract_strided_slice %65 {offsets = [0, 32], sizes = [2, 1], strides = [1, 1]} : vector<2x49xf32> to vector<2x1xf32>
    %249 = vector.extract_strided_slice %63 {offsets = [0, 68], sizes = [2, 256], strides = [1, 1]} : vector<2x358xf32> to vector<2x256xf32>
    %250 = vector.broadcast %248 : vector<2x1xf32> to vector<2x256xf32>
    %251 = arith.mulf %250, %249 : vector<2x256xf32>
    %252 = arith.addf %247, %251 : vector<2x256xf32>
    %253 = vector.extract_strided_slice %65 {offsets = [0, 39], sizes = [2, 1], strides = [1, 1]} : vector<2x49xf32> to vector<2x1xf32>
    %254 = vector.extract_strided_slice %63 {offsets = [0, 84], sizes = [2, 256], strides = [1, 1]} : vector<2x358xf32> to vector<2x256xf32>
    %255 = vector.broadcast %253 : vector<2x1xf32> to vector<2x256xf32>
    %256 = arith.mulf %255, %254 : vector<2x256xf32>
    %257 = arith.addf %252, %256 : vector<2x256xf32>
    %258 = vector.extract_strided_slice %65 {offsets = [0, 46], sizes = [2, 1], strides = [1, 1]} : vector<2x49xf32> to vector<2x1xf32>
    %259 = vector.extract_strided_slice %63 {offsets = [0, 100], sizes = [2, 256], strides = [1, 1]} : vector<2x358xf32> to vector<2x256xf32>
    %260 = vector.broadcast %258 : vector<2x1xf32> to vector<2x256xf32>
    %261 = arith.mulf %260, %259 : vector<2x256xf32>
    %262 = arith.addf %257, %261 : vector<2x256xf32>
    %263 = vector.extract_strided_slice %64 {offsets = [4, 0], sizes = [1, 256], strides = [1, 1]} : vector<7x256xf32> to vector<1x256xf32>
    %264 = vector.broadcast %263 : vector<1x256xf32> to vector<2x256xf32>
    %265 = arith.mulf %264, %262 : vector<2x256xf32>
    %266 = arith.addf %226, %265 : vector<2x256xf32>
    %cst_31 = arith.constant 0.000000e+00 : f32
    %267 = vector.broadcast %cst_31 : f32 to vector<2x256xf32>
    %268 = vector.extract_strided_slice %65 {offsets = [0, 5], sizes = [2, 1], strides = [1, 1]} : vector<2x49xf32> to vector<2x1xf32>
    %269 = vector.extract_strided_slice %63 {offsets = [0, 5], sizes = [2, 256], strides = [1, 1]} : vector<2x358xf32> to vector<2x256xf32>
    %270 = vector.broadcast %268 : vector<2x1xf32> to vector<2x256xf32>
    %271 = arith.mulf %270, %269 : vector<2x256xf32>
    %272 = arith.addf %267, %271 : vector<2x256xf32>
    %273 = vector.extract_strided_slice %65 {offsets = [0, 12], sizes = [2, 1], strides = [1, 1]} : vector<2x49xf32> to vector<2x1xf32>
    %274 = vector.extract_strided_slice %63 {offsets = [0, 21], sizes = [2, 256], strides = [1, 1]} : vector<2x358xf32> to vector<2x256xf32>
    %275 = vector.broadcast %273 : vector<2x1xf32> to vector<2x256xf32>
    %276 = arith.mulf %275, %274 : vector<2x256xf32>
    %277 = arith.addf %272, %276 : vector<2x256xf32>
    %278 = vector.extract_strided_slice %65 {offsets = [0, 19], sizes = [2, 1], strides = [1, 1]} : vector<2x49xf32> to vector<2x1xf32>
    %279 = vector.extract_strided_slice %63 {offsets = [0, 37], sizes = [2, 256], strides = [1, 1]} : vector<2x358xf32> to vector<2x256xf32>
    %280 = vector.broadcast %278 : vector<2x1xf32> to vector<2x256xf32>
    %281 = arith.mulf %280, %279 : vector<2x256xf32>
    %282 = arith.addf %277, %281 : vector<2x256xf32>
    %283 = vector.extract_strided_slice %65 {offsets = [0, 26], sizes = [2, 1], strides = [1, 1]} : vector<2x49xf32> to vector<2x1xf32>
    %284 = vector.extract_strided_slice %63 {offsets = [0, 53], sizes = [2, 256], strides = [1, 1]} : vector<2x358xf32> to vector<2x256xf32>
    %285 = vector.broadcast %283 : vector<2x1xf32> to vector<2x256xf32>
    %286 = arith.mulf %285, %284 : vector<2x256xf32>
    %287 = arith.addf %282, %286 : vector<2x256xf32>
    %288 = vector.extract_strided_slice %65 {offsets = [0, 33], sizes = [2, 1], strides = [1, 1]} : vector<2x49xf32> to vector<2x1xf32>
    %289 = vector.extract_strided_slice %63 {offsets = [0, 69], sizes = [2, 256], strides = [1, 1]} : vector<2x358xf32> to vector<2x256xf32>
    %290 = vector.broadcast %288 : vector<2x1xf32> to vector<2x256xf32>
    %291 = arith.mulf %290, %289 : vector<2x256xf32>
    %292 = arith.addf %287, %291 : vector<2x256xf32>
    %293 = vector.extract_strided_slice %65 {offsets = [0, 40], sizes = [2, 1], strides = [1, 1]} : vector<2x49xf32> to vector<2x1xf32>
    %294 = vector.extract_strided_slice %63 {offsets = [0, 85], sizes = [2, 256], strides = [1, 1]} : vector<2x358xf32> to vector<2x256xf32>
    %295 = vector.broadcast %293 : vector<2x1xf32> to vector<2x256xf32>
    %296 = arith.mulf %295, %294 : vector<2x256xf32>
    %297 = arith.addf %292, %296 : vector<2x256xf32>
    %298 = vector.extract_strided_slice %65 {offsets = [0, 47], sizes = [2, 1], strides = [1, 1]} : vector<2x49xf32> to vector<2x1xf32>
    %299 = vector.extract_strided_slice %63 {offsets = [0, 101], sizes = [2, 256], strides = [1, 1]} : vector<2x358xf32> to vector<2x256xf32>
    %300 = vector.broadcast %298 : vector<2x1xf32> to vector<2x256xf32>
    %301 = arith.mulf %300, %299 : vector<2x256xf32>
    %302 = arith.addf %297, %301 : vector<2x256xf32>
    %303 = vector.extract_strided_slice %64 {offsets = [5, 0], sizes = [1, 256], strides = [1, 1]} : vector<7x256xf32> to vector<1x256xf32>
    %304 = vector.broadcast %303 : vector<1x256xf32> to vector<2x256xf32>
    %305 = arith.mulf %304, %302 : vector<2x256xf32>
    %306 = arith.addf %266, %305 : vector<2x256xf32>
    %cst_32 = arith.constant 0.000000e+00 : f32
    %307 = vector.broadcast %cst_32 : f32 to vector<2x256xf32>
    %308 = vector.extract_strided_slice %65 {offsets = [0, 6], sizes = [2, 1], strides = [1, 1]} : vector<2x49xf32> to vector<2x1xf32>
    %309 = vector.extract_strided_slice %63 {offsets = [0, 6], sizes = [2, 256], strides = [1, 1]} : vector<2x358xf32> to vector<2x256xf32>
    %310 = vector.broadcast %308 : vector<2x1xf32> to vector<2x256xf32>
    %311 = arith.mulf %310, %309 : vector<2x256xf32>
    %312 = arith.addf %307, %311 : vector<2x256xf32>
    %313 = vector.extract_strided_slice %65 {offsets = [0, 13], sizes = [2, 1], strides = [1, 1]} : vector<2x49xf32> to vector<2x1xf32>
    %314 = vector.extract_strided_slice %63 {offsets = [0, 22], sizes = [2, 256], strides = [1, 1]} : vector<2x358xf32> to vector<2x256xf32>
    %315 = vector.broadcast %313 : vector<2x1xf32> to vector<2x256xf32>
    %316 = arith.mulf %315, %314 : vector<2x256xf32>
    %317 = arith.addf %312, %316 : vector<2x256xf32>
    %318 = vector.extract_strided_slice %65 {offsets = [0, 20], sizes = [2, 1], strides = [1, 1]} : vector<2x49xf32> to vector<2x1xf32>
    %319 = vector.extract_strided_slice %63 {offsets = [0, 38], sizes = [2, 256], strides = [1, 1]} : vector<2x358xf32> to vector<2x256xf32>
    %320 = vector.broadcast %318 : vector<2x1xf32> to vector<2x256xf32>
    %321 = arith.mulf %320, %319 : vector<2x256xf32>
    %322 = arith.addf %317, %321 : vector<2x256xf32>
    %323 = vector.extract_strided_slice %65 {offsets = [0, 27], sizes = [2, 1], strides = [1, 1]} : vector<2x49xf32> to vector<2x1xf32>
    %324 = vector.extract_strided_slice %63 {offsets = [0, 54], sizes = [2, 256], strides = [1, 1]} : vector<2x358xf32> to vector<2x256xf32>
    %325 = vector.broadcast %323 : vector<2x1xf32> to vector<2x256xf32>
    %326 = arith.mulf %325, %324 : vector<2x256xf32>
    %327 = arith.addf %322, %326 : vector<2x256xf32>
    %328 = vector.extract_strided_slice %65 {offsets = [0, 34], sizes = [2, 1], strides = [1, 1]} : vector<2x49xf32> to vector<2x1xf32>
    %329 = vector.extract_strided_slice %63 {offsets = [0, 70], sizes = [2, 256], strides = [1, 1]} : vector<2x358xf32> to vector<2x256xf32>
    %330 = vector.broadcast %328 : vector<2x1xf32> to vector<2x256xf32>
    %331 = arith.mulf %330, %329 : vector<2x256xf32>
    %332 = arith.addf %327, %331 : vector<2x256xf32>
    %333 = vector.extract_strided_slice %65 {offsets = [0, 41], sizes = [2, 1], strides = [1, 1]} : vector<2x49xf32> to vector<2x1xf32>
    %334 = vector.extract_strided_slice %63 {offsets = [0, 86], sizes = [2, 256], strides = [1, 1]} : vector<2x358xf32> to vector<2x256xf32>
    %335 = vector.broadcast %333 : vector<2x1xf32> to vector<2x256xf32>
    %336 = arith.mulf %335, %334 : vector<2x256xf32>
    %337 = arith.addf %332, %336 : vector<2x256xf32>
    %338 = vector.extract_strided_slice %65 {offsets = [0, 48], sizes = [2, 1], strides = [1, 1]} : vector<2x49xf32> to vector<2x1xf32>
    %339 = vector.extract_strided_slice %63 {offsets = [0, 102], sizes = [2, 256], strides = [1, 1]} : vector<2x358xf32> to vector<2x256xf32>
    %340 = vector.broadcast %338 : vector<2x1xf32> to vector<2x256xf32>
    %341 = arith.mulf %340, %339 : vector<2x256xf32>
    %342 = arith.addf %337, %341 : vector<2x256xf32>
    %343 = vector.extract_strided_slice %64 {offsets = [6, 0], sizes = [1, 256], strides = [1, 1]} : vector<7x256xf32> to vector<1x256xf32>
    %344 = vector.broadcast %343 : vector<1x256xf32> to vector<2x256xf32>
    %345 = arith.mulf %344, %342 : vector<2x256xf32>
    %346 = arith.addf %306, %345 : vector<2x256xf32>
    %347 = vector.extract_strided_slice %346 {offsets = [0, 0], sizes = [1, 256], strides = [1, 1]} : vector<2x256xf32> to vector<1x256xf32>
    %348 = vector.extract_strided_slice %346 {offsets = [1, 0], sizes = [1, 256], strides = [1, 1]} : vector<2x256xf32> to vector<1x256xf32>
    %349 = arith.addf %347, %348 : vector<1x256xf32>
    %c0_33 = arith.constant 0 : index
    %350 = memref.load %arg8[%c0_33] : memref<1xf32, #tpu.memory_space<smem>>
    %351 = vector.broadcast %350 : f32 to vector<1x256xf32>
    %352 = arith.addf %349, %351 : vector<1x256xf32>
    %353 = arith.negf %352 : vector<1x256xf32>
    %354 = math.exp %353 : vector<1x256xf32>
    %cst_34 = arith.constant 1.000000e+00 : f32
    %355 = vector.broadcast %cst_34 : f32 to vector<1x256xf32>
    %356 = arith.addf %355, %354 : vector<1x256xf32>
    %357 = arith.divf %355, %356 : vector<1x256xf32>
    %358 = vector.broadcast %357 : vector<1x256xf32> to vector<32x256xf32>
    %359 = arith.mulf %54, %358 : vector<32x256xf32>
    %c0_35 = arith.constant 0 : index
    %c0_36 = arith.constant 0 : index
    %c0_37 = arith.constant 0 : index
    %360 = vector.load %arg9[%c0_35, %c0_36, %c0_37] : memref<1x32x256xf32, #tpu.memory_space<vmem>>, vector<1x32x256xf32>
    %361 = vector.shape_cast %360 : vector<1x32x256xf32> to vector<32x256xf32>
    %362 = vector.shape_cast %359 : vector<32x256xf32> to vector<1x32x256xf32>
    tpu.vector_store %arg9[%c0_35, %c0_36, %c0_37], %362 {strides = array<i32>} : memref<1x32x256xf32, #tpu.memory_space<vmem>>, vector<1x32x256xf32>,
    return
  }
  func.func @transform_0(%arg0: i32) -> (i32, i32, i32) {
    %c0_i32 = arith.constant 0 : i32
    %c0_i32_0 = arith.constant 0 : i32
    %c0_i32_1 = arith.constant 0 : i32
    return %arg0, %c0_i32, %c0_i32_0 : i32, i32, i32
  }
  func.func @transform_1(%arg0: i32) -> (i32, i32) {
    %c0_i32 = arith.constant 0 : i32
    %c0_i32_0 = arith.constant 0 : i32
    %c0_i32_1 = arith.constant 0 : i32
    return %c0_i32, %c0_i32_0 : i32, i32
  }
  func.func @transform_2(%arg0: i32) -> (i32, i32) {
    %c0_i32 = arith.constant 0 : i32
    %c0_i32_0 = arith.constant 0 : i32
    %c0_i32_1 = arith.constant 0 : i32
    return %c0_i32, %c0_i32_0 : i32, i32
  }
  func.func @transform_3(%arg0: i32) -> (i32, i32) {
    %c0_i32 = arith.constant 0 : i32
    %c0_i32_0 = arith.constant 0 : i32
    %c0_i32_1 = arith.constant 0 : i32
    return %c0_i32, %c0_i32_0 : i32, i32
  }
  func.func @transform_4(%arg0: i32) -> (i32, i32) {
    %c0_i32 = arith.constant 0 : i32
    %c0_i32_0 = arith.constant 0 : i32
    %c0_i32_1 = arith.constant 0 : i32
    return %c0_i32, %c0_i32_0 : i32, i32
  }
  func.func @transform_5(%arg0: i32) -> (i32, i32) {
    %c0_i32 = arith.constant 0 : i32
    %c0_i32_0 = arith.constant 0 : i32
    %c0_i32_1 = arith.constant 0 : i32
    return %c0_i32, %c0_i32_0 : i32, i32
  }
  func.func @transform_6(%arg0: i32) -> i32 {
    %c0_i32 = arith.constant 0 : i32
    %c0_i32_0 = arith.constant 0 : i32
    return %c0_i32 : i32
  }
  func.func @transform_7(%arg0: i32) -> i32 {
    %c0_i32 = arith.constant 0 : i32
    %c0_i32_0 = arith.constant 0 : i32
    return %c0_i32 : i32
  }
  func.func @transform_8(%arg0: i32) -> (i32, i32, i32) {
    %c0_i32 = arith.constant 0 : i32
    %c0_i32_0 = arith.constant 0 : i32
    %c0_i32_1 = arith.constant 0 : i32
    return %arg0, %c0_i32, %c0_i32_0 : i32, i32, i32
  }
}

</mosaic_0001>

<llo_original>
// kernel: tpu_custom_call.1
$region0: #{tpu_custom_call.1}
  #allocation0 [shape = 'u32[]', space=smem, size = 0x4, offset = 0x4, fixed_abs, tag = 'smem constant byte address 0x4 - core index']
  #allocation1 [shape = 'u32[144,128]{1,0:T(1,128)}', space=vmem, size = 0x12000, scoped, tag = 'internal scratch']
  #allocation2 [shape = 'f32[1]{0:T(128)S(6)}', space=smem, size = 0x200, scoped, tag = 'scoped memory for tpu_custom_call.1']
  %s0 = inlined_call_operand.hbm [shape: f32[2,32,256], index: 0, kind: input, shape index: {}]
  %s1 = inlined_call_operand.vmem [shape: f32[32,2], index: 1, kind: input, shape index: {}]
  %s2 = inlined_call_operand.vmem [shape: f32[32,2], index: 2, kind: input, shape index: {}]
  %s3 = inlined_call_operand.vmem [shape: f32[32,1], index: 3, kind: input, shape index: {}]
  %s4 = inlined_call_operand.vmem [shape: f32[7,256], index: 4, kind: input, shape index: {}]
  %s5 = inlined_call_operand.vmem [shape: f32[2,49], index: 5, kind: input, shape index: {}]
  %s6 = inlined_call_operand.vmem [shape: f32[2], index: 6, kind: input, shape index: {}]
  %s7 = inlined_call_operand.<no memory space> [shape: f32[1], index: 7, kind: input, shape index: {}]
  %s8 = inlined_call_operand.hbm [shape: f32[2,32,256], index: 8, kind: output, shape index: {}]
  %s9 = sld [smem:[#allocation0]]
  $region73: #{tpu_custom_call.1} parent=0
    _
  %s11 = ssub.s32 1, %s9
  %s12 = scalar_select 0, %s11, %s9
  %13 = sst [smem:[#allocation2]] %s7
  $region1: #{tpu_custom_call.1} parent=0
    #allocation3 [shape = 'u8[65536]{0}', space=vmem, size = 0x10000, scoped, tag = 'input window, operand 0']
    #allocation4 [shape = 's32[2]{0}', space=sflag, size = 0x8, scoped, tag = 'scoped memory for tpu_custom_call.1']
    #allocation5 [shape = 's32[2]{0}', space=sflag, size = 0x8, scoped, tag = 'scoped memory for tpu_custom_call.1']
    #allocation6 [shape = 's32[2]{0}', space=sflag, size = 0x8, scoped, tag = 'scoped memory for tpu_custom_call.1']
    #allocation7 [shape = 'u8[512]{0}', space=smem, size = 0x200, scoped, tag = 'input window, operand 6, single buffered']
    #allocation8 [shape = 'u8[65536]{0}', space=vmem, size = 0x10000, scoped, tag = 'output window, operand 0']
    %14 = vsyncpa [#allocation4], 0
    %s15 = scalar_lea.sflag [#allocation4], 1
    %16 = vsyncpa %s15, 0
    %17 = vsyncpa [#allocation6], 0
    %18 = vsyncpa [#allocation5], 0
    %s19 = scalar_lea.sflag [#allocation5], 1
    %20 = vsyncpa %s19, 0
    loop: start=0, step=1, limit=4
    $region2: #{tpu_custom_call.1} parent=1 // loop_pre_header
      _
    $region3: #{tpu_custom_call.1} parent=1 // loop_header
      %s22 = sphi 0, %s26
      %p23 = scmp.ge.s32.totalorder %s22, 4
      %s32 = sphi 0, %s34
      %s35 = sphi 0, %s32
      %s36 = sphi 0, %s35
      %s52 = sphi 0, %s36
      %s56 = sphi 0, %s56
      %s58 = sphi 0, %s56
      %s59 = sphi 0, %s58
      %s73 = sphi 0, %s59
      %s77 = sphi 0, %s77
      %s79 = sphi 0, %s77
      %s80 = sphi 0, %s79
      %s94 = sphi 0, %s80
      %s98 = sphi 0, %s98
      %s100 = sphi 0, %s98
      %s101 = sphi 0, %s100
      %s115 = sphi 0, %s101
      %s119 = sphi 0, %s119
      %s121 = sphi 0, %s119
      %s122 = sphi 0, %s121
      %s136 = sphi 0, %s122
      %s140 = sphi 0, %s140
      %s142 = sphi 0, %s140
      %s143 = sphi 0, %s142
      %s157 = sphi 0, %s143
      %s161 = sphi 0, %s161
      %s163 = sphi 0, %s161
      %s164 = sphi 0, %s163
      %s178 = sphi 0, %s164
      %s182 = sphi 0, %s182
      %s184 = sphi 0, %s182
      %s185 = sphi 0, %s184
      %s199 = sphi 0, %s185
      %s205 = sphi 0, %s207
      %s208 = sphi 0, %s205
      %s209 = sphi 0, %s208
      %s225 = sphi 0, %s209
    $region4: #{tpu_custom_call.1} parent=1 // loop_header_branch
      %25 = sbr.rel (%p23) target = $region8
    $region5: #{tpu_custom_call.1} parent=1 // loop_body
      %s27 = ssub.s32 %s22, 1
      %s28 = ssub.s32 %s22, 2
      %s29 = sadd.s32 %s22, 1
      %s30 = ssub.s32 %s22, %s29
      %p31 = scmp.eq.s32.totalorder %s30, 0
      %s33 = sadd.s32 %s32, 1
      %s34 = scalar_select %p31, %s32, %s33
      %p37 = pneg %p31
      %p38 = scmp.eq.s32.totalorder %s22, 1
      %p39 = por %p37, %p38
      %p40 = scmp.ne.s32.totalorder %s32, %s35
      %p41 = scmp.eq.s32.totalorder %s22, 0
      %p42 = por %p40, %p41
      %p43 = scmp.ne.s32.totalorder %s32, %s35
      %p44 = scmp.eq.s32.totalorder %s27, 1
      %p45 = por %p43, %p44
      %p46 = scmp.ne.s32.totalorder %s35, %s36
      %p47 = scmp.eq.s32.totalorder %s27, 0
      %p48 = por %p46, %p47
      %p49 = scmp.ne.s32.totalorder %s35, %s36
      %p50 = scmp.eq.s32.totalorder %s28, 1
      %p51 = por %p49, %p50
      %p53 = scmp.ne.s32.totalorder %s36, %s52
      %p54 = scmp.eq.s32.totalorder %s28, 0
      %p55 = por %p53, %p54
      %s57 = sadd.s32 %s56, 1
      %p60 = scmp.eq.s32.totalorder %s22, 1
      %p61 = scmp.ne.s32.totalorder %s56, %s58
      %p62 = scmp.eq.s32.totalorder %s22, 0
      %p63 = por %p61, %p62
      %p64 = scmp.ne.s32.totalorder %s56, %s58
      %p65 = scmp.eq.s32.totalorder %s27, 1
      %p66 = por %p64, %p65
      %p67 = scmp.ne.s32.totalorder %s58, %s59
      %p68 = scmp.eq.s32.totalorder %s27, 0
      %p69 = por %p67, %p68
      %p70 = scmp.ne.s32.totalorder %s58, %s59
      %p71 = scmp.eq.s32.totalorder %s28, 1
      %p72 = por %p70, %p71
      %p74 = scmp.ne.s32.totalorder %s59, %s73
      %p75 = scmp.eq.s32.totalorder %s28, 0
      %p76 = por %p74, %p75
      %s78 = sadd.s32 %s77, 1
      %p81 = scmp.eq.s32.totalorder %s22, 1
      %p82 = scmp.ne.s32.totalorder %s77, %s79
      %p83 = scmp.eq.s32.totalorder %s22, 0
      %p84 = por %p82, %p83
      %p85 = scmp.ne.s32.totalorder %s77, %s79
      %p86 = scmp.eq.s32.totalorder %s27, 1
      %p87 = por %p85, %p86
      %p88 = scmp.ne.s32.totalorder %s79, %s80
      %p89 = scmp.eq.s32.totalorder %s27, 0
      %p90 = por %p88, %p89
      %p91 = scmp.ne.s32.totalorder %s79, %s80
      %p92 = scmp.eq.s32.totalorder %s28, 1
      %p93 = por %p91, %p92
      %p95 = scmp.ne.s32.totalorder %s80, %s94
      %p96 = scmp.eq.s32.totalorder %s28, 0
      %p97 = por %p95, %p96
      %s99 = sadd.s32 %s98, 1
      %p102 = scmp.eq.s32.totalorder %s22, 1
      %p103 = scmp.ne.s32.totalorder %s98, %s100
      %p104 = scmp.eq.s32.totalorder %s22, 0
      %p105 = por %p103, %p104
      %p106 = scmp.ne.s32.totalorder %s98, %s100
      %p107 = scmp.eq.s32.totalorder %s27, 1
      %p108 = por %p106, %p107
      %p109 = scmp.ne.s32.totalorder %s100, %s101
      %p110 = scmp.eq.s32.totalorder %s27, 0
      %p111 = por %p109, %p110
      %p112 = scmp.ne.s32.totalorder %s100, %s101
      %p113 = scmp.eq.s32.totalorder %s28, 1
      %p114 = por %p112, %p113
      %p116 = scmp.ne.s32.totalorder %s101, %s115
      %p117 = scmp.eq.s32.totalorder %s28, 0
      %p118 = por %p116, %p117
      %s120 = sadd.s32 %s119, 1
      %p123 = scmp.eq.s32.totalorder %s22, 1
      %p124 = scmp.ne.s32.totalorder %s119, %s121
      %p125 = scmp.eq.s32.totalorder %s22, 0
      %p126 = por %p124, %p125
      %p127 = scmp.ne.s32.totalorder %s119, %s121
      %p128 = scmp.eq.s32.totalorder %s27, 1
      %p129 = por %p127, %p128
      %p130 = scmp.ne.s32.totalorder %s121, %s122
      %p131 = scmp.eq.s32.totalorder %s27, 0
      %p132 = por %p130, %p131
      %p133 = scmp.ne.s32.totalorder %s121, %s122
      %p134 = scmp.eq.s32.totalorder %s28, 1
      %p135 = por %p133, %p134
      %p137 = scmp.ne.s32.totalorder %s122, %s136
      %p138 = scmp.eq.s32.totalorder %s28, 0
      %p139 = por %p137, %p138
      %s141 = sadd.s32 %s140, 1
      %p144 = scmp.eq.s32.totalorder %s22, 1
      %p145 = scmp.ne.s32.totalorder %s140, %s142
      %p146 = scmp.eq.s32.totalorder %s22, 0
      %p147 = por %p145, %p146
      %p148 = scmp.ne.s32.totalorder %s140, %s142
      %p149 = scmp.eq.s32.totalorder %s27, 1
      %p150 = por %p148, %p149
      %p151 = scmp.ne.s32.totalorder %s142, %s143
      %p152 = scmp.eq.s32.totalorder %s27, 0
      %p153 = por %p151, %p152
      %p154 = scmp.ne.s32.totalorder %s142, %s143
      %p155 = scmp.eq.s32.totalorder %s28, 1
      %p156 = por %p154, %p155
      %p158 = scmp.ne.s32.totalorder %s143, %s157
      %p159 = scmp.eq.s32.totalorder %s28, 0
      %p160 = por %p158, %p159
      %s162 = sadd.s32 %s161, 1
      %p165 = scmp.eq.s32.totalorder %s22, 1
      %p166 = scmp.ne.s32.totalorder %s161, %s163
      %p167 = scmp.eq.s32.totalorder %s22, 0
      %p168 = por %p166, %p167
      %p169 = scmp.ne.s32.totalorder %s161, %s163
      %p170 = scmp.eq.s32.totalorder %s27, 1
      %p171 = por %p169, %p170
      %p172 = scmp.ne.s32.totalorder %s163, %s164
      %p173 = scmp.eq.s32.totalorder %s27, 0
      %p174 = por %p172, %p173
      %p175 = scmp.ne.s32.totalorder %s163, %s164
      %p176 = scmp.eq.s32.totalorder %s28, 1
      %p177 = por %p175, %p176
      %p179 = scmp.ne.s32.totalorder %s164, %s178
      %p180 = scmp.eq.s32.totalorder %s28, 0
      %p181 = por %p179, %p180
      %s183 = sadd.s32 %s182, 1
      %p186 = scmp.eq.s32.totalorder %s22, 1
      %p187 = scmp.ne.s32.totalorder %s182, %s184
      %p188 = scmp.eq.s32.totalorder %s22, 0
      %p189 = por %p187, %p188
      %p190 = scmp.ne.s32.totalorder %s182, %s184
      %p191 = scmp.eq.s32.totalorder %s27, 1
      %p192 = por %p190, %p191
      %p193 = scmp.ne.s32.totalorder %s184, %s185
      %p194 = scmp.eq.s32.totalorder %s27, 0
      %p195 = por %p193, %p194
      %p196 = scmp.ne.s32.totalorder %s184, %s185
      %p197 = scmp.eq.s32.totalorder %s28, 1
      %p198 = por %p196, %p197
      %p200 = scmp.ne.s32.totalorder %s185, %s199
      %p201 = scmp.eq.s32.totalorder %s28, 0
      %p202 = por %p200, %p201
      %s203 = ssub.s32 %s22, %s29
      %p204 = scmp.eq.s32.totalorder %s203, 0
      %s206 = sadd.s32 %s205, 1
      %s207 = scalar_select %p204, %s205, %s206
      %p210 = pneg %p204
      %p211 = scmp.eq.s32.totalorder %s22, 1
      %p212 = por %p210, %p211
      %p213 = scmp.ne.s32.totalorder %s205, %s208
      %p214 = scmp.eq.s32.totalorder %s22, 0
      %p215 = por %p213, %p214
      %p216 = scmp.ne.s32.totalorder %s205, %s208
      %p217 = scmp.eq.s32.totalorder %s27, 1
      %p218 = por %p216, %p217
      %p219 = scmp.ne.s32.totalorder %s208, %s209
      %p220 = scmp.eq.s32.totalorder %s27, 0
      %p221 = por %p219, %p220
      %p222 = scmp.ne.s32.totalorder %s208, %s209
      %p223 = scmp.eq.s32.totalorder %s28, 1
      %p224 = por %p222, %p223
      %p226 = scmp.ne.s32.totalorder %s209, %s225
      %p227 = scmp.eq.s32.totalorder %s28, 0
      %p228 = por %p226, %p227
      %p229 = scmp.le.s32.totalorder 1, %s22
      %p230 = scmp.lt.s32.totalorder %s22, 3
      %p231 = pnand %p229, %p230
      %p232 = pneg %p231
      // Predicated region
      $region9: #{tpu_custom_call.1} parent=5 // pred_check
        _
      $region10: #{tpu_custom_call.1} parent=5 // pred_check_branch
        %234 = sbr.rel (%p231) target = $region12
      $region11: #{tpu_custom_call.1} parent=5 // pred_region
        %s235 = ssub.s32 %s22, 1
        // Predicated region
        $region13: #{tpu_custom_call.1} parent=11 // pred_check
          %p236 = pneg %p69
        $region14: #{tpu_custom_call.1} parent=11 // pred_check_branch
          %238 = sbr.rel (%p236) target = $region16
        $region15: #{tpu_custom_call.1} parent=11 // pred_region
          _
        $region16: #{tpu_custom_call.1} parent=11 // pred_fallthru
          _
        // Predicated region
        $region17: #{tpu_custom_call.1} parent=11 // pred_check
          %p239 = pneg %p90
        $region18: #{tpu_custom_call.1} parent=11 // pred_check_branch
          %241 = sbr.rel (%p239) target = $region20
        $region19: #{tpu_custom_call.1} parent=11 // pred_region
          _
        $region20: #{tpu_custom_call.1} parent=11 // pred_fallthru
          _
        // Predicated region
        $region21: #{tpu_custom_call.1} parent=11 // pred_check
          %p242 = pneg %p111
        $region22: #{tpu_custom_call.1} parent=11 // pred_check_branch
          %244 = sbr.rel (%p242) target = $region24
        $region23: #{tpu_custom_call.1} parent=11 // pred_region
          _
        $region24: #{tpu_custom_call.1} parent=11 // pred_fallthru
          _
        // Predicated region
        $region25: #{tpu_custom_call.1} parent=11 // pred_check
          %p245 = pneg %p132
        $region26: #{tpu_custom_call.1} parent=11 // pred_check_branch
          %247 = sbr.rel (%p245) target = $region28
        $region27: #{tpu_custom_call.1} parent=11 // pred_region
          _
        $region28: #{tpu_custom_call.1} parent=11 // pred_fallthru
          _
        // Predicated region
        $region29: #{tpu_custom_call.1} parent=11 // pred_check
          %p248 = pneg %p153
        $region30: #{tpu_custom_call.1} parent=11 // pred_check_branch
          %250 = sbr.rel (%p248) target = $region32
        $region31: #{tpu_custom_call.1} parent=11 // pred_region
          _
        $region32: #{tpu_custom_call.1} parent=11 // pred_fallthru
          _
        // Predicated region
        $region33: #{tpu_custom_call.1} parent=11 // pred_check
          %p251 = pneg %p174
        $region34: #{tpu_custom_call.1} parent=11 // pred_check_branch
          %253 = sbr.rel (%p251) target = $region36
        $region35: #{tpu_custom_call.1} parent=11 // pred_region
          %s255 = ssub.s32 16, 16
          %256 = vsyncadd [#allocation6], %s255
          %s258 = sshll.u32 %s6, 4
          %s259 = int_to_ptr.vmem [resolvable:$true] %s258
          %261 = dma.vmem_to_smem %s259, 16, [#allocation7], [#allocation6]
        $region36: #{tpu_custom_call.1} parent=11 // pred_fallthru
          _
        // Predicated region
        $region37: #{tpu_custom_call.1} parent=11 // pred_check
          %p262 = pneg %p195
        $region38: #{tpu_custom_call.1} parent=11 // pred_check_branch
          %264 = sbr.rel (%p262) target = $region40
        $region39: #{tpu_custom_call.1} parent=11 // pred_region
          _
        $region40: #{tpu_custom_call.1} parent=11 // pred_fallthru
          _
      $region12: #{tpu_custom_call.1} parent=5 // pred_fallthru
        _
      %p265 = scmp.lt.s32.totalorder %s22, 2
      // Predicated region
      $region41: #{tpu_custom_call.1} parent=5 // pred_check
        %p266 = pneg %p265
      $region42: #{tpu_custom_call.1} parent=5 // pred_check_branch
        %268 = sbr.rel (%p266) target = $region44
      $region43: #{tpu_custom_call.1} parent=5 // pred_region
        // Predicated region
        $region45: #{tpu_custom_call.1} parent=43 // pred_check
          %p269 = pneg %p42
        $region46: #{tpu_custom_call.1} parent=43 // pred_check_branch
          %271 = sbr.rel (%p269) target = $region48
        $region47: #{tpu_custom_call.1} parent=43 // pred_region
          %s272 = sand.u32 %s32, 1
          %s273 = scalar_lea.sflag [#allocation4], %s272
          %s274 = sand.u32 %s32, 1
          %s275 = smul.addr %s274, 64
          %s276 = scalar_lea.vmem [#allocation3], %s275
          %s278 = ssub.s32 1024, 1024
          %279 = vsyncadd %s273, %s278
          %s280 = smul.addr %s22, 8
          %s281 = smul.addr %s280, 128
          %s282 = scalar_lea.hbm %s0, %s281
          %s283 = sshll.u32 %s276, 4
          %s284 = int_to_ptr.vmem [resolvable:$true] %s283
          %289 = dma.hbm_to_vmem [thread:$0]  %s282, 1024, %s284, %s273, 256, 256, 16
        $region48: #{tpu_custom_call.1} parent=43 // pred_fallthru
          _
      $region44: #{tpu_custom_call.1} parent=5 // pred_fallthru
        _
      %p290 = scmp.le.s32.totalorder 1, %s22
      %p291 = scmp.lt.s32.totalorder %s22, 3
      %p292 = pnand %p290, %p291
      %p293 = pneg %p292
      // Predicated region
      $region49: #{tpu_custom_call.1} parent=5 // pred_check
        _
      $region50: #{tpu_custom_call.1} parent=5 // pred_check_branch
        %295 = sbr.rel (%p292) target = $region52
      $region51: #{tpu_custom_call.1} parent=5 // pred_region
        %s296 = ssub.s32 %s22, 1
        %s297 = sand.u32 %s35, 1
        %s298 = scalar_lea.sflag [#allocation4], %s297
        %s299 = sand.u32 %s35, 1
        %s300 = smul.addr %s299, 64
        %s301 = scalar_lea.vmem [#allocation3], %s300
        // Predicated region
        $region53: #{tpu_custom_call.1} parent=51 // pred_check
          %p302 = pneg %p48
        $region54: #{tpu_custom_call.1} parent=51 // pred_check_branch
          %304 = sbr.rel (%p302) target = $region56
        $region55: #{tpu_custom_call.1} parent=51 // pred_region
          %305 = dma.done %s298, 1024
        $region56: #{tpu_custom_call.1} parent=51 // pred_fallthru
          _
        // Predicated region
        $region57: #{tpu_custom_call.1} parent=51 // pred_check
          %p306 = pneg %p174
        $region58: #{tpu_custom_call.1} parent=51 // pred_check_branch
          %308 = sbr.rel (%p306) target = $region60
        $region59: #{tpu_custom_call.1} parent=51 // pred_region
          %309 = dma.done [#allocation6], 16
        $region60: #{tpu_custom_call.1} parent=51 // pred_fallthru
          _
        %310 = sfence
        %s311 = sand.u32 %s35, 1
        %s312 = scalar_lea.sflag [#allocation4], %s311
        %s313 = sand.u32 %s35, 1
        %s314 = smul.addr %s313, 64
        %s315 = scalar_lea.vmem [#allocation3], %s314
        %p316 = pneg %p48
        %p317 = pneg %p45
        %p318 = pneg %p69
        %p319 = pneg %p66
        %p320 = pneg %p90
        %p321 = pneg %p87
        %p322 = pneg %p111
        %p323 = pneg %p108
        %p324 = pneg %p132
        %p325 = pneg %p129
        %p326 = pneg %p153
        %p327 = pneg %p150
        %p328 = pneg %p174
        %p329 = pneg %p171
        %p330 = pneg %p195
        %p331 = pneg %p192
        %p332 = pneg %p221
        %p333 = pneg %p218
        %s334 = sand.u32 %s208, 1
        %s335 = scalar_lea.sflag [#allocation5], %s334
        %s336 = sand.u32 %s208, 1
        %s337 = smul.addr %s336, 64
        %s338 = scalar_lea.vmem [#allocation8], %s337
        %v339 = vld [vmem:[%s301] sm:$0xff]
        %v340 = vld [vmem:[%s301 + $0x8] sm:$0xff]
        %v341 = vld [vmem:[%s301 + $0x10] sm:$0xff]
        %v342 = vld [vmem:[%s301 + $0x18] sm:$0xff]
        %v343 = vld [vmem:[%s301 + $0x20] sm:$0xff]
        %v344 = vld [vmem:[%s301 + $0x28] sm:$0xff]
        %v345 = vld [vmem:[%s301 + $0x30] sm:$0xff]
        %v346 = vld [vmem:[%s301 + $0x38] sm:$0xff]
        %v347 = vadd.f32 %v339, %v340
        %348 = vadd.xlane.f32.xlu0 %v347
        %v349 = vpop.xlane.xlu0 %348
        %v350 = vadd.f32 %v341, %v342
        %351 = vadd.xlane.f32.xlu0 %v350
        %v352 = vpop.xlane.xlu0 %351
        %v353 = vadd.f32 %v343, %v344
        %354 = vadd.xlane.f32.xlu0 %v353
        %v355 = vpop.xlane.xlu0 %354
        %v356 = vadd.f32 %v345, %v346
        %357 = vadd.xlane.f32.xlu0 %v356
        %v358 = vpop.xlane.xlu0 %357
        %v359 = vrcp.pop 256.0
        %v360 = vmul.f32 %v349, %v359
        %v361 = vmul.f32 %v352, %v359
        %v362 = vmul.f32 %v355, %v359
        %v363 = vmul.f32 %v358, %v359
        %v364 = vmax.f32 %v339, %v340
        %365 = vmax.xlane.f32.xlu0 %v364
        %v366 = vpop.xlane.xlu0 %365
        %v367 = vmax.f32 %v341, %v342
        %368 = vmax.xlane.f32.xlu0 %v367
        %v369 = vpop.xlane.xlu0 %368
        %v370 = vmax.f32 %v343, %v344
        %371 = vmax.xlane.f32.xlu0 %v370
        %v372 = vpop.xlane.xlu0 %371
        %v373 = vmax.f32 %v345, %v346
        %374 = vmax.xlane.f32.xlu0 %v373
        %v375 = vpop.xlane.xlu0 %374
        %vm376 = vcmask 7168
        %v377 = vsel %vm376, %v360, %v366
        %v378 = vsel %vm376, %v361, %v369
        %v379 = vsel %vm376, %v362, %v372
        %v380 = vsel %vm376, %v363, %v375
        %v381 = vld [vmem:[%s1] sm:$0xff]
        %v382 = vld [vmem:[%s1 + $0x8] sm:$0xff]
        %v383 = vld [vmem:[%s1 + $0x10] sm:$0xff]
        %v384 = vld [vmem:[%s1 + $0x18] sm:$0xff]
        %v385 = vld [vmem:[%s2] sm:$0xff]
        %v386 = vld [vmem:[%s2 + $0x8] sm:$0xff]
        %v387 = vld [vmem:[%s2 + $0x10] sm:$0xff]
        %v388 = vld [vmem:[%s2 + $0x18] sm:$0xff]
        %390 = vset.pattern.permute.xlu0 0
        %391 = vperm.xlu0 %390, %v381
        %v392 = vpop.permute.xlu0 %391
        %395 = vset.pattern.permute.xlu0 0
        %396 = vperm.xlu0 %395, %v382
        %v397 = vpop.permute.xlu0 %396
        %400 = vset.pattern.permute.xlu0 0
        %401 = vperm.xlu0 %400, %v383
        %v402 = vpop.permute.xlu0 %401
        %405 = vset.pattern.permute.xlu0 0
        %406 = vperm.xlu0 %405, %v384
        %v407 = vpop.permute.xlu0 %406
        %v409 = vmul.f32 %v392, %v377
        %v410 = vmul.f32 %v397, %v378
        %v411 = vmul.f32 %v402, %v379
        %v412 = vmul.f32 %v407, %v380
        %vm413 = vcmask 15360
        %v414 = vsel %vm413, %v409, 0.0
        %v415 = vsel %vm413, %v410, 0.0
        %v416 = vadd.f32 %v414, %v415
        %v417 = vsel %vm413, %v411, 0.0
        %v418 = vadd.f32 %v416, %v417
        %v419 = vsel %vm413, %v412, 0.0
        %v420 = vadd.f32 %v418, %v419
        %v421 = vrot.slane %v420, 4
        %v422 = vadd.f32 %v420, %v421
        %v423 = vrot.slane %v422, 2
        %v424 = vadd.f32 %v422, %v423
        %v425 = vrot.slane %v424, 1
        %v426 = vadd.f32 %v424, %v425
        %s427 = sld [smem:[#allocation7]]
        %v428 = vstv %s427
        %v429 = vadd.f32 %v426, %v428
        %v430 = vmax.f32 %v429, 0.0
        %432 = vset.pattern.permute.xlu0 0
        %433 = vperm.xlu0 %432, %v385
        %v434 = vpop.permute.xlu0 %433
        %437 = vset.pattern.permute.xlu0 0
        %438 = vperm.xlu0 %437, %v386
        %v439 = vpop.permute.xlu0 %438
        %442 = vset.pattern.permute.xlu0 0
        %443 = vperm.xlu0 %442, %v387
        %v444 = vpop.permute.xlu0 %443
        %447 = vset.pattern.permute.xlu0 0
        %448 = vperm.xlu0 %447, %v388
        %v449 = vpop.permute.xlu0 %448
        %v451 = vmul.f32 %v434, %v430
        %v452 = vmul.f32 %v439, %v430
        %v453 = vmul.f32 %v444, %v430
        %v454 = vmul.f32 %v449, %v430
        %v455 = vadd.f32 %v451, 0.0
        %v456 = vadd.f32 %v452, 0.0
        %v457 = vadd.f32 %v453, 0.0
        %v458 = vadd.f32 %v454, 0.0
        %459 = vset.pattern.permute.xlu0 1
        %460 = vperm.xlu0 %459, %v381
        %v461 = vpop.permute.xlu0 %460
        %463 = vset.pattern.permute.xlu0 1
        %464 = vperm.xlu0 %463, %v382
        %v465 = vpop.permute.xlu0 %464
        %467 = vset.pattern.permute.xlu0 1
        %468 = vperm.xlu0 %467, %v383
        %v469 = vpop.permute.xlu0 %468
        %471 = vset.pattern.permute.xlu0 1
        %472 = vperm.xlu0 %471, %v384
        %v473 = vpop.permute.xlu0 %472
        %v475 = vmul.f32 %v461, %v377
        %v476 = vmul.f32 %v465, %v378
        %v477 = vmul.f32 %v469, %v379
        %v478 = vmul.f32 %v473, %v380
        %v479 = vsel %vm413, %v475, 0.0
        %v480 = vsel %vm413, %v476, 0.0
        %v481 = vadd.f32 %v479, %v480
        %v482 = vsel %vm413, %v477, 0.0
        %v483 = vadd.f32 %v481, %v482
        %v484 = vsel %vm413, %v478, 0.0
        %v485 = vadd.f32 %v483, %v484
        %v486 = vrot.slane %v485, 4
        %v487 = vadd.f32 %v485, %v486
        %v488 = vrot.slane %v487, 2
        %v489 = vadd.f32 %v487, %v488
        %v490 = vrot.slane %v489, 1
        %v491 = vadd.f32 %v489, %v490
        %s492 = sld [smem:[#allocation7 + $0x1]]
        %v493 = vstv %s492
        %v494 = vadd.f32 %v491, %v493
        %v495 = vmax.f32 %v494, 0.0
        %496 = vset.pattern.permute.xlu0 1
        %497 = vperm.xlu0 %496, %v385
        %v498 = vpop.permute.xlu0 %497
        %500 = vset.pattern.permute.xlu0 1
        %501 = vperm.xlu0 %500, %v386
        %v502 = vpop.permute.xlu0 %501
        %504 = vset.pattern.permute.xlu0 1
        %505 = vperm.xlu0 %504, %v387
        %v506 = vpop.permute.xlu0 %505
        %508 = vset.pattern.permute.xlu0 1
        %509 = vperm.xlu0 %508, %v388
        %v510 = vpop.permute.xlu0 %509
        %v512 = vmul.f32 %v498, %v495
        %v513 = vmul.f32 %v502, %v495
        %v514 = vmul.f32 %v506, %v495
        %v515 = vmul.f32 %v510, %v495
        %v516 = vadd.f32 %v455, %v512
        %v517 = vadd.f32 %v456, %v513
        %v518 = vadd.f32 %v457, %v514
        %v519 = vadd.f32 %v458, %v515
        %v520 = vld [vmem:[%s3] sm:$0xff]
        %v521 = vld [vmem:[%s3 + $0x8] sm:$0xff]
        %v522 = vld [vmem:[%s3 + $0x10] sm:$0xff]
        %v523 = vld [vmem:[%s3 + $0x18] sm:$0xff]
        %525 = vset.pattern.permute.xlu0 0
        %526 = vperm.xlu0 %525, %v520
        %v527 = vpop.permute.xlu0 %526
        %530 = vset.pattern.permute.xlu0 0
        %531 = vperm.xlu0 %530, %v521
        %v532 = vpop.permute.xlu0 %531
        %535 = vset.pattern.permute.xlu0 0
        %536 = vperm.xlu0 %535, %v522
        %v537 = vpop.permute.xlu0 %536
        %540 = vset.pattern.permute.xlu0 0
        %541 = vperm.xlu0 %540, %v523
        %v542 = vpop.permute.xlu0 %541
        %v544 = vadd.f32 %v516, %v527
        %v545 = vadd.f32 %v517, %v532
        %v546 = vadd.f32 %v518, %v537
        %v547 = vadd.f32 %v519, %v542
        %552 = vrot.lane.b32.xlu0 %v544, 127
        %v553 = vpop.permute.xlu0 %552
        %554 = vrot.lane.b32.xlu0 %v545, 127
        %v555 = vpop.permute.xlu0 %554
        %556 = vrot.lane.b32.xlu0 %v546, 127
        %v557 = vpop.permute.xlu0 %556
        %558 = vrot.lane.b32.xlu0 %v547, 127
        %v559 = vpop.permute.xlu0 %558
        %v564 = vadd.f32 %v544, %v553
        %v565 = vadd.f32 %v545, %v555
        %v566 = vadd.f32 %v546, %v557
        %v567 = vadd.f32 %v547, %v559
        %v568 = vxor.u32 %v564, 2147483648
        %v569 = vxor.u32 %v565, 2147483648
        %v570 = vxor.u32 %v566, 2147483648
        %v571 = vxor.u32 %v567, 2147483648
        %v572 = vmul.f32 %v568, 1.442695
        %v573 = vpow.pop %v572
        %v574 = vmul.f32 %v569, 1.442695
        %v575 = vpow.pop %v574
        %v576 = vmul.f32 %v570, 1.442695
        %v577 = vpow.pop %v576
        %v578 = vmul.f32 %v571, 1.442695
        %v579 = vpow.pop %v578
        %v580 = vadd.f32 %v573, 1.0
        %v581 = vadd.f32 %v575, 1.0
        %v582 = vadd.f32 %v577, 1.0
        %v583 = vadd.f32 %v579, 1.0
        %v584 = vrcp.pop %v580
        %v585 = vmul.f32 1.0, %v584
        %v586 = vrcp.pop %v581
        %v587 = vmul.f32 1.0, %v586
        %v588 = vrcp.pop %v582
        %v589 = vmul.f32 1.0, %v588
        %v590 = vrcp.pop %v583
        %v591 = vmul.f32 1.0, %v590
        %593 = vset.pattern.permute.xlu0 0
        %594 = vperm.xlu0 %593, %v585
        %v595 = vpop.permute.xlu0 %594
        %598 = vset.pattern.permute.xlu0 0
        %599 = vperm.xlu0 %598, %v587
        %v600 = vpop.permute.xlu0 %599
        %603 = vset.pattern.permute.xlu0 0
        %604 = vperm.xlu0 %603, %v589
        %v605 = vpop.permute.xlu0 %604
        %608 = vset.pattern.permute.xlu0 0
        %609 = vperm.xlu0 %608, %v591
        %v610 = vpop.permute.xlu0 %609
        %v612 = vmul.f32 %v339, %v595
        %v613 = vmul.f32 %v340, %v595
        %v614 = vmul.f32 %v341, %v600
        %v615 = vmul.f32 %v342, %v600
        %v616 = vmul.f32 %v343, %v605
        %v617 = vmul.f32 %v344, %v605
        %v618 = vmul.f32 %v345, %v610
        %v619 = vmul.f32 %v346, %v610
        %v620 = vadd.f32 %v612, %v614
        %v621 = vadd.f32 %v620, %v616
        %v622 = vadd.f32 %v621, %v618
        %v623 = vrot.slane %v622, 4
        %v624 = vadd.f32 %v622, %v623
        %v625 = vrot.slane %v624, 2
        %v626 = vadd.f32 %v624, %v625
        %v627 = vrot.slane %v626, 1
        %v628 = vadd.f32 %v626, %v627
        %v629 = vadd.f32 %v613, %v615
        %v630 = vadd.f32 %v629, %v617
        %v631 = vadd.f32 %v630, %v619
        %v632 = vrot.slane %v631, 4
        %v633 = vadd.f32 %v631, %v632
        %v634 = vrot.slane %v633, 2
        %v635 = vadd.f32 %v633, %v634
        %v636 = vrot.slane %v635, 1
        %v637 = vadd.f32 %v635, %v636
        %v638 = vrcp.pop 32.0
        %v639 = vmul.f32 %v628, %v638
        %v640 = vmul.f32 %v637, %v638
        %v641 = vmax.f32 %v612, %v616
        %v642 = vmax.f32 %v614, %v618
        %v643 = vmax.f32 %v641, %v642
        %v644 = vrot.slane %v643, 4
        %v645 = vmax.f32 %v643, %v644
        %v646 = vrot.slane %v645, 2
        %v647 = vmax.f32 %v645, %v646
        %v648 = vrot.slane %v647, 1
        %v649 = vmax.f32 %v647, %v648
        %v650 = vmax.f32 %v613, %v617
        %v651 = vmax.f32 %v615, %v619
        %v652 = vmax.f32 %v650, %v651
        %v653 = vrot.slane %v652, 4
        %v654 = vmax.f32 %v652, %v653
        %v655 = vrot.slane %v654, 2
        %v656 = vmax.f32 %v654, %v655
        %v657 = vrot.slane %v656, 1
        %v658 = vmax.f32 %v656, %v657
        %vm659 = vcmask 1040384
        %v660 = vsel %vm659, %v639, %v649
        %v661 = vsel %vm659, %v640, %v658
        %664 = vrot.lane.b32.xlu0 %v660, 51
        %v665 = vpop.permute.xlu0 %664
        %666 = vrot.lane.b32.xlu0 %v661, 51
        %v667 = vpop.permute.xlu0 %666
        %vm668 = vcmask 416768
        %v669 = vsel %vm668, %v665, %v667
        %v673 = vsel %vm668, 0.0, %v665
        %v674 = vsel %vm668, %v667, 0.0
        %v675 = vld [vmem:[%s4] sm:$0x7f]
        %v676 = vld [vmem:[%s4 + $0x8] sm:$0x7f]
        %v677 = vld [vmem:[%s5] sm:$0x3]
        %679 = vset.pattern.permute.xlu0 0
        %680 = vperm.xlu0 %679, %v677
        %v681 = vpop.permute.xlu0 %680
        %v683 = vmul.f32 %v681, %v673
        %v684 = vmul.f32 %v681, %v669
        %v685 = vadd.f32 %v683, 0.0
        %v686 = vadd.f32 %v684, 0.0
        %687 = vset.pattern.permute.xlu0 7
        %688 = vperm.xlu0 %687, %v677
        %v689 = vpop.permute.xlu0 %688
        %v691 = vmul.f32 %v689, %v673
        %v692 = vmul.f32 %v689, %v669
        %v693 = vmul.f32 %v689, %v674
        %697 = vrot.lane.b32.xlu0 %v691, 112
        %v698 = vpop.permute.xlu0 %697
        %699 = vrot.lane.b32.xlu0 %v692, 112
        %v700 = vpop.permute.xlu0 %699
        %701 = vrot.lane.b32.xlu0 %v693, 112
        %v702 = vpop.permute.xlu0 %701
        %vm703 = vcmask 916480
        %v704 = vsel %vm703, %v698, %v700
        %v705 = vsel %vm703, %v700, %v702
        %v708 = vadd.f32 %v685, %v704
        %v709 = vadd.f32 %v686, %v705
        %710 = vset.pattern.permute.xlu0 14
        %711 = vperm.xlu0 %710, %v677
        %v712 = vpop.permute.xlu0 %711
        %v714 = vmul.f32 %v712, %v673
        %v715 = vmul.f32 %v712, %v669
        %v716 = vmul.f32 %v712, %v674
        %720 = vrot.lane.b32.xlu0 %v714, 96
        %v721 = vpop.permute.xlu0 %720
        %722 = vrot.lane.b32.xlu0 %v715, 96
        %v723 = vpop.permute.xlu0 %722
        %724 = vrot.lane.b32.xlu0 %v716, 96
        %v725 = vpop.permute.xlu0 %724
        %vm726 = vcmask 785408
        %v727 = vsel %vm726, %v721, %v723
        %v728 = vsel %vm726, %v723, %v725
        %v731 = vadd.f32 %v708, %v727
        %v732 = vadd.f32 %v709, %v728
        %733 = vset.pattern.permute.xlu0 21
        %734 = vperm.xlu0 %733, %v677
        %v735 = vpop.permute.xlu0 %734
        %v737 = vmul.f32 %v735, %v673
        %v738 = vmul.f32 %v735, %v669
        %v739 = vmul.f32 %v735, %v674
        %743 = vrot.lane.b32.xlu0 %v737, 80
        %v744 = vpop.permute.xlu0 %743
        %745 = vrot.lane.b32.xlu0 %v738, 80
        %v746 = vpop.permute.xlu0 %745
        %747 = vrot.lane.b32.xlu0 %v739, 80
        %v748 = vpop.permute.xlu0 %747
        %vm749 = vcmask 654336
        %v750 = vsel %vm749, %v744, %v746
        %v751 = vsel %vm749, %v746, %v748
        %v754 = vadd.f32 %v731, %v750
        %v755 = vadd.f32 %v732, %v751
        %756 = vset.pattern.permute.xlu0 28
        %757 = vperm.xlu0 %756, %v677
        %v758 = vpop.permute.xlu0 %757
        %v760 = vmul.f32 %v758, %v673
        %v761 = vmul.f32 %v758, %v669
        %v762 = vmul.f32 %v758, %v674
        %766 = vrot.lane.b32.xlu0 %v760, 64
        %v767 = vpop.permute.xlu0 %766
        %768 = vrot.lane.b32.xlu0 %v761, 64
        %v769 = vpop.permute.xlu0 %768
        %770 = vrot.lane.b32.xlu0 %v762, 64
        %v771 = vpop.permute.xlu0 %770
        %vm772 = vcmask 523264
        %v773 = vsel %vm772, %v767, %v769
        %v774 = vsel %vm772, %v769, %v771
        %v777 = vadd.f32 %v754, %v773
        %v778 = vadd.f32 %v755, %v774
        %779 = vset.pattern.permute.xlu0 35
        %780 = vperm.xlu0 %779, %v677
        %v781 = vpop.permute.xlu0 %780
        %v783 = vmul.f32 %v781, %v673
        %v784 = vmul.f32 %v781, %v669
        %v785 = vmul.f32 %v781, %v674
        %789 = vrot.lane.b32.xlu0 %v783, 48
        %v790 = vpop.permute.xlu0 %789
        %791 = vrot.lane.b32.xlu0 %v784, 48
        %v792 = vpop.permute.xlu0 %791
        %793 = vrot.lane.b32.xlu0 %v785, 48
        %v794 = vpop.permute.xlu0 %793
        %vm795 = vcmask 392192
        %v796 = vsel %vm795, %v790, %v792
        %v797 = vsel %vm795, %v792, %v794
        %v800 = vadd.f32 %v777, %v796
        %v801 = vadd.f32 %v778, %v797
        %802 = vset.pattern.permute.xlu0 42
        %803 = vperm.xlu0 %802, %v677
        %v804 = vpop.permute.xlu0 %803
        %v806 = vmul.f32 %v804, %v673
        %v807 = vmul.f32 %v804, %v669
        %v808 = vmul.f32 %v804, %v674
        %812 = vrot.lane.b32.xlu0 %v806, 32
        %v813 = vpop.permute.xlu0 %812
        %814 = vrot.lane.b32.xlu0 %v807, 32
        %v815 = vpop.permute.xlu0 %814
        %816 = vrot.lane.b32.xlu0 %v808, 32
        %v817 = vpop.permute.xlu0 %816
        %vm818 = vcmask 261120
        %v819 = vsel %vm818, %v813, %v815
        %v820 = vsel %vm818, %v815, %v817
        %v823 = vadd.f32 %v800, %v819
        %v824 = vadd.f32 %v801, %v820
        %v825 = vlaneseq
        %v826 = vshrl.u32 %v825, 7
        %v827 = vsub.s32 0, %v826
        %v828 = vrot.slane %v675, %v827
        %v829 = vlaneseq
        %v830 = vshrl.u32 %v829, 7
        %v831 = vsub.s32 0, %v830
        %v832 = vrot.slane %v676, %v831
        %v833 = vmul.f32 %v828, %v823
        %v834 = vmul.f32 %v832, %v824
        %v835 = vadd.f32 %v833, 0.0
        %v836 = vadd.f32 %v834, 0.0
        %837 = vset.pattern.permute.xlu0 1
        %838 = vperm.xlu0 %837, %v677
        %v839 = vpop.permute.xlu0 %838
        %v841 = vmul.f32 %v839, %v673
        %v842 = vmul.f32 %v839, %v669
        %v843 = vmul.f32 %v839, %v674
        %v844 = vadd.f32 %v841, 0.0
        %v845 = vadd.f32 %v842, 0.0
        %v846 = vadd.f32 %v843, 0.0
        %847 = vset.pattern.permute.xlu0 8
        %848 = vperm.xlu0 %847, %v677
        %v849 = vpop.permute.xlu0 %848
        %v851 = vmul.f32 %v849, %v673
        %v852 = vmul.f32 %v849, %v669
        %v853 = vmul.f32 %v849, %v674
        %857 = vrot.lane.b32.xlu0 %v851, 112
        %v858 = vpop.permute.xlu0 %857
        %859 = vrot.lane.b32.xlu0 %v852, 112
        %v860 = vpop.permute.xlu0 %859
        %861 = vrot.lane.b32.xlu0 %v853, 112
        %v862 = vpop.permute.xlu0 %861
        %v863 = vsel %vm703, %v858, %v860
        %v864 = vsel %vm703, %v860, %v862
        %v868 = vadd.f32 %v844, %v863
        %v869 = vadd.f32 %v845, %v864
        %v870 = vadd.f32 %v846, %v862
        %871 = vset.pattern.permute.xlu0 15
        %872 = vperm.xlu0 %871, %v677
        %v873 = vpop.permute.xlu0 %872
        %v875 = vmul.f32 %v873, %v673
        %v876 = vmul.f32 %v873, %v669
        %v877 = vmul.f32 %v873, %v674
        %881 = vrot.lane.b32.xlu0 %v875, 96
        %v882 = vpop.permute.xlu0 %881
        %883 = vrot.lane.b32.xlu0 %v876, 96
        %v884 = vpop.permute.xlu0 %883
        %885 = vrot.lane.b32.xlu0 %v877, 96
        %v886 = vpop.permute.xlu0 %885
        %v887 = vsel %vm726, %v882, %v884
        %v888 = vsel %vm726, %v884, %v886
        %v892 = vadd.f32 %v868, %v887
        %v893 = vadd.f32 %v869, %v888
        %v894 = vadd.f32 %v870, %v886
        %895 = vset.pattern.permute.xlu0 22
        %896 = vperm.xlu0 %895, %v677
        %v897 = vpop.permute.xlu0 %896
        %v899 = vmul.f32 %v897, %v673
        %v900 = vmul.f32 %v897, %v669
        %v901 = vmul.f32 %v897, %v674
        %905 = vrot.lane.b32.xlu0 %v899, 80
        %v906 = vpop.permute.xlu0 %905
        %907 = vrot.lane.b32.xlu0 %v900, 80
        %v908 = vpop.permute.xlu0 %907
        %909 = vrot.lane.b32.xlu0 %v901, 80
        %v910 = vpop.permute.xlu0 %909
        %v911 = vsel %vm749, %v906, %v908
        %v912 = vsel %vm749, %v908, %v910
        %v916 = vadd.f32 %v892, %v911
        %v917 = vadd.f32 %v893, %v912
        %v918 = vadd.f32 %v894, %v910
        %919 = vset.pattern.permute.xlu0 29
        %920 = vperm.xlu0 %919, %v677
        %v921 = vpop.permute.xlu0 %920
        %v923 = vmul.f32 %v921, %v673
        %v924 = vmul.f32 %v921, %v669
        %v925 = vmul.f32 %v921, %v674
        %929 = vrot.lane.b32.xlu0 %v923, 64
        %v930 = vpop.permute.xlu0 %929
        %931 = vrot.lane.b32.xlu0 %v924, 64
        %v932 = vpop.permute.xlu0 %931
        %933 = vrot.lane.b32.xlu0 %v925, 64
        %v934 = vpop.permute.xlu0 %933
        %v935 = vsel %vm772, %v930, %v932
        %v936 = vsel %vm772, %v932, %v934
        %v940 = vadd.f32 %v916, %v935
        %v941 = vadd.f32 %v917, %v936
        %v942 = vadd.f32 %v918, %v934
        %943 = vset.pattern.permute.xlu0 36
        %944 = vperm.xlu0 %943, %v677
        %v945 = vpop.permute.xlu0 %944
        %v947 = vmul.f32 %v945, %v673
        %v948 = vmul.f32 %v945, %v669
        %v949 = vmul.f32 %v945, %v674
        %953 = vrot.lane.b32.xlu0 %v947, 48
        %v954 = vpop.permute.xlu0 %953
        %955 = vrot.lane.b32.xlu0 %v948, 48
        %v956 = vpop.permute.xlu0 %955
        %957 = vrot.lane.b32.xlu0 %v949, 48
        %v958 = vpop.permute.xlu0 %957
        %v959 = vsel %vm795, %v954, %v956
        %v960 = vsel %vm795, %v956, %v958
        %v964 = vadd.f32 %v940, %v959
        %v965 = vadd.f32 %v941, %v960
        %v966 = vadd.f32 %v942, %v958
        %967 = vset.pattern.permute.xlu0 43
        %968 = vperm.xlu0 %967, %v677
        %v969 = vpop.permute.xlu0 %968
        %v971 = vmul.f32 %v969, %v673
        %v972 = vmul.f32 %v969, %v669
        %v973 = vmul.f32 %v969, %v674
        %977 = vrot.lane.b32.xlu0 %v971, 32
        %v978 = vpop.permute.xlu0 %977
        %979 = vrot.lane.b32.xlu0 %v972, 32
        %v980 = vpop.permute.xlu0 %979
        %981 = vrot.lane.b32.xlu0 %v973, 32
        %v982 = vpop.permute.xlu0 %981
        %v983 = vsel %vm818, %v978, %v980
        %v984 = vsel %vm818, %v980, %v982
        %v988 = vadd.f32 %v964, %v983
        %v989 = vadd.f32 %v965, %v984
        %v990 = vadd.f32 %v966, %v982
        %v991 = vlaneseq
        %v992 = vshrl.u32 %v991, 7
        %v993 = vsub.s32 1, %v992
        %v994 = vrot.slane %v675, %v993
        %v995 = vlaneseq
        %v996 = vshrl.u32 %v995, 7
        %v997 = vsub.s32 1, %v996
        %v998 = vrot.slane %v676, %v997
        %1002 = vrot.lane.b32.xlu0 %v988, 127
        %v1003 = vpop.permute.xlu0 %1002
        %1004 = vrot.lane.b32.xlu0 %v989, 127
        %v1005 = vpop.permute.xlu0 %1004
        %1006 = vrot.lane.b32.xlu0 %v990, 127
        %v1007 = vpop.permute.xlu0 %1006
        %vm1008 = vcmask 1039360
        %v1009 = vsel %vm1008, %v1003, %v1005
        %v1010 = vsel %vm1008, %v1005, %v1007
        %v1013 = vmul.f32 %v994, %v1009
        %v1014 = vmul.f32 %v998, %v1010
        %v1015 = vadd.f32 %v835, %v1013
        %v1016 = vadd.f32 %v836, %v1014
        %1017 = vset.pattern.permute.xlu0 2
        %1018 = vperm.xlu0 %1017, %v677
        %v1019 = vpop.permute.xlu0 %1018
        %v1021 = vmul.f32 %v1019, %v673
        %v1022 = vmul.f32 %v1019, %v669
        %v1023 = vmul.f32 %v1019, %v674
        %v1024 = vadd.f32 %v1021, 0.0
        %v1025 = vadd.f32 %v1022, 0.0
        %v1026 = vadd.f32 %v1023, 0.0
        %1027 = vset.pattern.permute.xlu0 9
        %1028 = vperm.xlu0 %1027, %v677
        %v1029 = vpop.permute.xlu0 %1028
        %v1031 = vmul.f32 %v1029, %v673
        %v1032 = vmul.f32 %v1029, %v669
        %v1033 = vmul.f32 %v1029, %v674
        %1037 = vrot.lane.b32.xlu0 %v1031, 112
        %v1038 = vpop.permute.xlu0 %1037
        %1039 = vrot.lane.b32.xlu0 %v1032, 112
        %v1040 = vpop.permute.xlu0 %1039
        %1041 = vrot.lane.b32.xlu0 %v1033, 112
        %v1042 = vpop.permute.xlu0 %1041
        %v1043 = vsel %vm703, %v1038, %v1040
        %v1044 = vsel %vm703, %v1040, %v1042
        %v1048 = vadd.f32 %v1024, %v1043
        %v1049 = vadd.f32 %v1025, %v1044
        %v1050 = vadd.f32 %v1026, %v1042
        %1051 = vset.pattern.permute.xlu0 16
        %1052 = vperm.xlu0 %1051, %v677
        %v1053 = vpop.permute.xlu0 %1052
        %v1055 = vmul.f32 %v1053, %v673
        %v1056 = vmul.f32 %v1053, %v669
        %v1057 = vmul.f32 %v1053, %v674
        %1061 = vrot.lane.b32.xlu0 %v1055, 96
        %v1062 = vpop.permute.xlu0 %1061
        %1063 = vrot.lane.b32.xlu0 %v1056, 96
        %v1064 = vpop.permute.xlu0 %1063
        %1065 = vrot.lane.b32.xlu0 %v1057, 96
        %v1066 = vpop.permute.xlu0 %1065
        %v1067 = vsel %vm726, %v1062, %v1064
        %v1068 = vsel %vm726, %v1064, %v1066
        %v1072 = vadd.f32 %v1048, %v1067
        %v1073 = vadd.f32 %v1049, %v1068
        %v1074 = vadd.f32 %v1050, %v1066
        %1075 = vset.pattern.permute.xlu0 23
        %1076 = vperm.xlu0 %1075, %v677
        %v1077 = vpop.permute.xlu0 %1076
        %v1079 = vmul.f32 %v1077, %v673
        %v1080 = vmul.f32 %v1077, %v669
        %v1081 = vmul.f32 %v1077, %v674
        %1085 = vrot.lane.b32.xlu0 %v1079, 80
        %v1086 = vpop.permute.xlu0 %1085
        %1087 = vrot.lane.b32.xlu0 %v1080, 80
        %v1088 = vpop.permute.xlu0 %1087
        %1089 = vrot.lane.b32.xlu0 %v1081, 80
        %v1090 = vpop.permute.xlu0 %1089
        %v1091 = vsel %vm749, %v1086, %v1088
        %v1092 = vsel %vm749, %v1088, %v1090
        %v1096 = vadd.f32 %v1072, %v1091
        %v1097 = vadd.f32 %v1073, %v1092
        %v1098 = vadd.f32 %v1074, %v1090
        %1099 = vset.pattern.permute.xlu0 30
        %1100 = vperm.xlu0 %1099, %v677
        %v1101 = vpop.permute.xlu0 %1100
        %v1103 = vmul.f32 %v1101, %v673
        %v1104 = vmul.f32 %v1101, %v669
        %v1105 = vmul.f32 %v1101, %v674
        %1109 = vrot.lane.b32.xlu0 %v1103, 64
        %v1110 = vpop.permute.xlu0 %1109
        %1111 = vrot.lane.b32.xlu0 %v1104, 64
        %v1112 = vpop.permute.xlu0 %1111
        %1113 = vrot.lane.b32.xlu0 %v1105, 64
        %v1114 = vpop.permute.xlu0 %1113
        %v1115 = vsel %vm772, %v1110, %v1112
        %v1116 = vsel %vm772, %v1112, %v1114
        %v1120 = vadd.f32 %v1096, %v1115
        %v1121 = vadd.f32 %v1097, %v1116
        %v1122 = vadd.f32 %v1098, %v1114
        %1123 = vset.pattern.permute.xlu0 37
        %1124 = vperm.xlu0 %1123, %v677
        %v1125 = vpop.permute.xlu0 %1124
        %v1127 = vmul.f32 %v1125, %v673
        %v1128 = vmul.f32 %v1125, %v669
        %v1129 = vmul.f32 %v1125, %v674
        %1133 = vrot.lane.b32.xlu0 %v1127, 48
        %v1134 = vpop.permute.xlu0 %1133
        %1135 = vrot.lane.b32.xlu0 %v1128, 48
        %v1136 = vpop.permute.xlu0 %1135
        %1137 = vrot.lane.b32.xlu0 %v1129, 48
        %v1138 = vpop.permute.xlu0 %1137
        %v1139 = vsel %vm795, %v1134, %v1136
        %v1140 = vsel %vm795, %v1136, %v1138
        %v1144 = vadd.f32 %v1120, %v1139
        %v1145 = vadd.f32 %v1121, %v1140
        %v1146 = vadd.f32 %v1122, %v1138
        %1147 = vset.pattern.permute.xlu0 44
        %1148 = vperm.xlu0 %1147, %v677
        %v1149 = vpop.permute.xlu0 %1148
        %v1151 = vmul.f32 %v1149, %v673
        %v1152 = vmul.f32 %v1149, %v669
        %v1153 = vmul.f32 %v1149, %v674
        %1157 = vrot.lane.b32.xlu0 %v1151, 32
        %v1158 = vpop.permute.xlu0 %1157
        %1159 = vrot.lane.b32.xlu0 %v1152, 32
        %v1160 = vpop.permute.xlu0 %1159
        %1161 = vrot.lane.b32.xlu0 %v1153, 32
        %v1162 = vpop.permute.xlu0 %1161
        %v1163 = vsel %vm818, %v1158, %v1160
        %v1164 = vsel %vm818, %v1160, %v1162
        %v1168 = vadd.f32 %v1144, %v1163
        %v1169 = vadd.f32 %v1145, %v1164
        %v1170 = vadd.f32 %v1146, %v1162
        %v1171 = vlaneseq
        %v1172 = vshrl.u32 %v1171, 7
        %v1173 = vsub.s32 2, %v1172
        %v1174 = vrot.slane %v675, %v1173
        %v1175 = vlaneseq
        %v1176 = vshrl.u32 %v1175, 7
        %v1177 = vsub.s32 2, %v1176
        %v1178 = vrot.slane %v676, %v1177
        %1182 = vrot.lane.b32.xlu0 %v1168, 126
        %v1183 = vpop.permute.xlu0 %1182
        %1184 = vrot.lane.b32.xlu0 %v1169, 126
        %v1185 = vpop.permute.xlu0 %1184
        %1186 = vrot.lane.b32.xlu0 %v1170, 126
        %v1187 = vpop.permute.xlu0 %1186
        %vm1188 = vcmask 1031168
        %v1189 = vsel %vm1188, %v1183, %v1185
        %v1190 = vsel %vm1188, %v1185, %v1187
        %v1193 = vmul.f32 %v1174, %v1189
        %v1194 = vmul.f32 %v1178, %v1190
        %v1195 = vadd.f32 %v1015, %v1193
        %v1196 = vadd.f32 %v1016, %v1194
        %1197 = vset.pattern.permute.xlu0 3
        %1198 = vperm.xlu0 %1197, %v677
        %v1199 = vpop.permute.xlu0 %1198
        %v1201 = vmul.f32 %v1199, %v673
        %v1202 = vmul.f32 %v1199, %v669
        %v1203 = vmul.f32 %v1199, %v674
        %v1204 = vadd.f32 %v1201, 0.0
        %v1205 = vadd.f32 %v1202, 0.0
        %v1206 = vadd.f32 %v1203, 0.0
        %1207 = vset.pattern.permute.xlu0 10
        %1208 = vperm.xlu0 %1207, %v677
        %v1209 = vpop.permute.xlu0 %1208
        %v1211 = vmul.f32 %v1209, %v673
        %v1212 = vmul.f32 %v1209, %v669
        %v1213 = vmul.f32 %v1209, %v674
        %1217 = vrot.lane.b32.xlu0 %v1211, 112
        %v1218 = vpop.permute.xlu0 %1217
        %1219 = vrot.lane.b32.xlu0 %v1212, 112
        %v1220 = vpop.permute.xlu0 %1219
        %1221 = vrot.lane.b32.xlu0 %v1213, 112
        %v1222 = vpop.permute.xlu0 %1221
        %v1223 = vsel %vm703, %v1218, %v1220
        %v1224 = vsel %vm703, %v1220, %v1222
        %v1228 = vadd.f32 %v1204, %v1223
        %v1229 = vadd.f32 %v1205, %v1224
        %v1230 = vadd.f32 %v1206, %v1222
        %1231 = vset.pattern.permute.xlu0 17
        %1232 = vperm.xlu0 %1231, %v677
        %v1233 = vpop.permute.xlu0 %1232
        %v1235 = vmul.f32 %v1233, %v673
        %v1236 = vmul.f32 %v1233, %v669
        %v1237 = vmul.f32 %v1233, %v674
        %1241 = vrot.lane.b32.xlu0 %v1235, 96
        %v1242 = vpop.permute.xlu0 %1241
        %1243 = vrot.lane.b32.xlu0 %v1236, 96
        %v1244 = vpop.permute.xlu0 %1243
        %1245 = vrot.lane.b32.xlu0 %v1237, 96
        %v1246 = vpop.permute.xlu0 %1245
        %v1247 = vsel %vm726, %v1242, %v1244
        %v1248 = vsel %vm726, %v1244, %v1246
        %v1252 = vadd.f32 %v1228, %v1247
        %v1253 = vadd.f32 %v1229, %v1248
        %v1254 = vadd.f32 %v1230, %v1246
        %1255 = vset.pattern.permute.xlu0 24
        %1256 = vperm.xlu0 %1255, %v677
        %v1257 = vpop.permute.xlu0 %1256
        %v1259 = vmul.f32 %v1257, %v673
        %v1260 = vmul.f32 %v1257, %v669
        %v1261 = vmul.f32 %v1257, %v674
        %1265 = vrot.lane.b32.xlu0 %v1259, 80
        %v1266 = vpop.permute.xlu0 %1265
        %1267 = vrot.lane.b32.xlu0 %v1260, 80
        %v1268 = vpop.permute.xlu0 %1267
        %1269 = vrot.lane.b32.xlu0 %v1261, 80
        %v1270 = vpop.permute.xlu0 %1269
        %v1271 = vsel %vm749, %v1266, %v1268
        %v1272 = vsel %vm749, %v1268, %v1270
        %v1276 = vadd.f32 %v1252, %v1271
        %v1277 = vadd.f32 %v1253, %v1272
        %v1278 = vadd.f32 %v1254, %v1270
        %1279 = vset.pattern.permute.xlu0 31
        %1280 = vperm.xlu0 %1279, %v677
        %v1281 = vpop.permute.xlu0 %1280
        %v1283 = vmul.f32 %v1281, %v673
        %v1284 = vmul.f32 %v1281, %v669
        %v1285 = vmul.f32 %v1281, %v674
        %1289 = vrot.lane.b32.xlu0 %v1283, 64
        %v1290 = vpop.permute.xlu0 %1289
        %1291 = vrot.lane.b32.xlu0 %v1284, 64
        %v1292 = vpop.permute.xlu0 %1291
        %1293 = vrot.lane.b32.xlu0 %v1285, 64
        %v1294 = vpop.permute.xlu0 %1293
        %v1295 = vsel %vm772, %v1290, %v1292
        %v1296 = vsel %vm772, %v1292, %v1294
        %v1300 = vadd.f32 %v1276, %v1295
        %v1301 = vadd.f32 %v1277, %v1296
        %v1302 = vadd.f32 %v1278, %v1294
        %1303 = vset.pattern.permute.xlu0 38
        %1304 = vperm.xlu0 %1303, %v677
        %v1305 = vpop.permute.xlu0 %1304
        %v1307 = vmul.f32 %v1305, %v673
        %v1308 = vmul.f32 %v1305, %v669
        %v1309 = vmul.f32 %v1305, %v674
        %1313 = vrot.lane.b32.xlu0 %v1307, 48
        %v1314 = vpop.permute.xlu0 %1313
        %1315 = vrot.lane.b32.xlu0 %v1308, 48
        %v1316 = vpop.permute.xlu0 %1315
        %1317 = vrot.lane.b32.xlu0 %v1309, 48
        %v1318 = vpop.permute.xlu0 %1317
        %v1319 = vsel %vm795, %v1314, %v1316
        %v1320 = vsel %vm795, %v1316, %v1318
        %v1324 = vadd.f32 %v1300, %v1319
        %v1325 = vadd.f32 %v1301, %v1320
        %v1326 = vadd.f32 %v1302, %v1318
        %1327 = vset.pattern.permute.xlu0 45
        %1328 = vperm.xlu0 %1327, %v677
        %v1329 = vpop.permute.xlu0 %1328
        %v1331 = vmul.f32 %v1329, %v673
        %v1332 = vmul.f32 %v1329, %v669
        %v1333 = vmul.f32 %v1329, %v674
        %1337 = vrot.lane.b32.xlu0 %v1331, 32
        %v1338 = vpop.permute.xlu0 %1337
        %1339 = vrot.lane.b32.xlu0 %v1332, 32
        %v1340 = vpop.permute.xlu0 %1339
        %1341 = vrot.lane.b32.xlu0 %v1333, 32
        %v1342 = vpop.permute.xlu0 %1341
        %v1343 = vsel %vm818, %v1338, %v1340
        %v1344 = vsel %vm818, %v1340, %v1342
        %v1348 = vadd.f32 %v1324, %v1343
        %v1349 = vadd.f32 %v1325, %v1344
        %v1350 = vadd.f32 %v1326, %v1342
        %v1351 = vlaneseq
        %v1352 = vshrl.u32 %v1351, 7
        %v1353 = vsub.s32 3, %v1352
        %v1354 = vrot.slane %v675, %v1353
        %v1355 = vlaneseq
        %v1356 = vshrl.u32 %v1355, 7
        %v1357 = vsub.s32 3, %v1356
        %v1358 = vrot.slane %v676, %v1357
        %1362 = vrot.lane.b32.xlu0 %v1348, 125
        %v1363 = vpop.permute.xlu0 %1362
        %1364 = vrot.lane.b32.xlu0 %v1349, 125
        %v1365 = vpop.permute.xlu0 %1364
        %1366 = vrot.lane.b32.xlu0 %v1350, 125
        %v1367 = vpop.permute.xlu0 %1366
        %vm1368 = vcmask 1022976
        %v1369 = vsel %vm1368, %v1363, %v1365
        %v1370 = vsel %vm1368, %v1365, %v1367
        %v1373 = vmul.f32 %v1354, %v1369
        %v1374 = vmul.f32 %v1358, %v1370
        %v1375 = vadd.f32 %v1195, %v1373
        %v1376 = vadd.f32 %v1196, %v1374
        %1377 = vset.pattern.permute.xlu0 4
        %1378 = vperm.xlu0 %1377, %v677
        %v1379 = vpop.permute.xlu0 %1378
        %v1381 = vmul.f32 %v1379, %v673
        %v1382 = vmul.f32 %v1379, %v669
        %v1383 = vmul.f32 %v1379, %v674
        %v1384 = vadd.f32 %v1381, 0.0
        %v1385 = vadd.f32 %v1382, 0.0
        %v1386 = vadd.f32 %v1383, 0.0
        %1387 = vset.pattern.permute.xlu0 11
        %1388 = vperm.xlu0 %1387, %v677
        %v1389 = vpop.permute.xlu0 %1388
        %v1391 = vmul.f32 %v1389, %v673
        %v1392 = vmul.f32 %v1389, %v669
        %v1393 = vmul.f32 %v1389, %v674
        %1397 = vrot.lane.b32.xlu0 %v1391, 112
        %v1398 = vpop.permute.xlu0 %1397
        %1399 = vrot.lane.b32.xlu0 %v1392, 112
        %v1400 = vpop.permute.xlu0 %1399
        %1401 = vrot.lane.b32.xlu0 %v1393, 112
        %v1402 = vpop.permute.xlu0 %1401
        %v1403 = vsel %vm703, %v1398, %v1400
        %v1404 = vsel %vm703, %v1400, %v1402
        %v1408 = vadd.f32 %v1384, %v1403
        %v1409 = vadd.f32 %v1385, %v1404
        %v1410 = vadd.f32 %v1386, %v1402
        %1411 = vset.pattern.permute.xlu0 18
        %1412 = vperm.xlu0 %1411, %v677
        %v1413 = vpop.permute.xlu0 %1412
        %v1415 = vmul.f32 %v1413, %v673
        %v1416 = vmul.f32 %v1413, %v669
        %v1417 = vmul.f32 %v1413, %v674
        %1421 = vrot.lane.b32.xlu0 %v1415, 96
        %v1422 = vpop.permute.xlu0 %1421
        %1423 = vrot.lane.b32.xlu0 %v1416, 96
        %v1424 = vpop.permute.xlu0 %1423
        %1425 = vrot.lane.b32.xlu0 %v1417, 96
        %v1426 = vpop.permute.xlu0 %1425
        %v1427 = vsel %vm726, %v1422, %v1424
        %v1428 = vsel %vm726, %v1424, %v1426
        %v1432 = vadd.f32 %v1408, %v1427
        %v1433 = vadd.f32 %v1409, %v1428
        %v1434 = vadd.f32 %v1410, %v1426
        %1435 = vset.pattern.permute.xlu0 25
        %1436 = vperm.xlu0 %1435, %v677
        %v1437 = vpop.permute.xlu0 %1436
        %v1439 = vmul.f32 %v1437, %v673
        %v1440 = vmul.f32 %v1437, %v669
        %v1441 = vmul.f32 %v1437, %v674
        %1445 = vrot.lane.b32.xlu0 %v1439, 80
        %v1446 = vpop.permute.xlu0 %1445
        %1447 = vrot.lane.b32.xlu0 %v1440, 80
        %v1448 = vpop.permute.xlu0 %1447
        %1449 = vrot.lane.b32.xlu0 %v1441, 80
        %v1450 = vpop.permute.xlu0 %1449
        %v1451 = vsel %vm749, %v1446, %v1448
        %v1452 = vsel %vm749, %v1448, %v1450
        %v1456 = vadd.f32 %v1432, %v1451
        %v1457 = vadd.f32 %v1433, %v1452
        %v1458 = vadd.f32 %v1434, %v1450
        %1459 = vset.pattern.permute.xlu0 32
        %1460 = vperm.xlu0 %1459, %v677
        %v1461 = vpop.permute.xlu0 %1460
        %v1463 = vmul.f32 %v1461, %v673
        %v1464 = vmul.f32 %v1461, %v669
        %v1465 = vmul.f32 %v1461, %v674
        %1469 = vrot.lane.b32.xlu0 %v1463, 64
        %v1470 = vpop.permute.xlu0 %1469
        %1471 = vrot.lane.b32.xlu0 %v1464, 64
        %v1472 = vpop.permute.xlu0 %1471
        %1473 = vrot.lane.b32.xlu0 %v1465, 64
        %v1474 = vpop.permute.xlu0 %1473
        %v1475 = vsel %vm772, %v1470, %v1472
        %v1476 = vsel %vm772, %v1472, %v1474
        %v1480 = vadd.f32 %v1456, %v1475
        %v1481 = vadd.f32 %v1457, %v1476
        %v1482 = vadd.f32 %v1458, %v1474
        %1483 = vset.pattern.permute.xlu0 39
        %1484 = vperm.xlu0 %1483, %v677
        %v1485 = vpop.permute.xlu0 %1484
        %v1487 = vmul.f32 %v1485, %v673
        %v1488 = vmul.f32 %v1485, %v669
        %v1489 = vmul.f32 %v1485, %v674
        %1493 = vrot.lane.b32.xlu0 %v1487, 48
        %v1494 = vpop.permute.xlu0 %1493
        %1495 = vrot.lane.b32.xlu0 %v1488, 48
        %v1496 = vpop.permute.xlu0 %1495
        %1497 = vrot.lane.b32.xlu0 %v1489, 48
        %v1498 = vpop.permute.xlu0 %1497
        %v1499 = vsel %vm795, %v1494, %v1496
        %v1500 = vsel %vm795, %v1496, %v1498
        %v1504 = vadd.f32 %v1480, %v1499
        %v1505 = vadd.f32 %v1481, %v1500
        %v1506 = vadd.f32 %v1482, %v1498
        %1507 = vset.pattern.permute.xlu0 46
        %1508 = vperm.xlu0 %1507, %v677
        %v1509 = vpop.permute.xlu0 %1508
        %v1511 = vmul.f32 %v1509, %v673
        %v1512 = vmul.f32 %v1509, %v669
        %v1513 = vmul.f32 %v1509, %v674
        %1517 = vrot.lane.b32.xlu0 %v1511, 32
        %v1518 = vpop.permute.xlu0 %1517
        %1519 = vrot.lane.b32.xlu0 %v1512, 32
        %v1520 = vpop.permute.xlu0 %1519
        %1521 = vrot.lane.b32.xlu0 %v1513, 32
        %v1522 = vpop.permute.xlu0 %1521
        %v1523 = vsel %vm818, %v1518, %v1520
        %v1524 = vsel %vm818, %v1520, %v1522
        %v1528 = vadd.f32 %v1504, %v1523
        %v1529 = vadd.f32 %v1505, %v1524
        %v1530 = vadd.f32 %v1506, %v1522
        %v1531 = vlaneseq
        %v1532 = vshrl.u32 %v1531, 7
        %v1533 = vsub.s32 4, %v1532
        %v1534 = vrot.slane %v675, %v1533
        %v1535 = vlaneseq
        %v1536 = vshrl.u32 %v1535, 7
        %v1537 = vsub.s32 4, %v1536
        %v1538 = vrot.slane %v676, %v1537
        %1542 = vrot.lane.b32.xlu0 %v1528, 124
        %v1543 = vpop.permute.xlu0 %1542
        %1544 = vrot.lane.b32.xlu0 %v1529, 124
        %v1545 = vpop.permute.xlu0 %1544
        %1546 = vrot.lane.b32.xlu0 %v1530, 124
        %v1547 = vpop.permute.xlu0 %1546
        %vm1548 = vcmask 1014784
        %v1549 = vsel %vm1548, %v1543, %v1545
        %v1550 = vsel %vm1548, %v1545, %v1547
        %v1553 = vmul.f32 %v1534, %v1549
        %v1554 = vmul.f32 %v1538, %v1550
        %v1555 = vadd.f32 %v1375, %v1553
        %v1556 = vadd.f32 %v1376, %v1554
        %1557 = vset.pattern.permute.xlu0 5
        %1558 = vperm.xlu0 %1557, %v677
        %v1559 = vpop.permute.xlu0 %1558
        %v1561 = vmul.f32 %v1559, %v673
        %v1562 = vmul.f32 %v1559, %v669
        %v1563 = vmul.f32 %v1559, %v674
        %v1564 = vadd.f32 %v1561, 0.0
        %v1565 = vadd.f32 %v1562, 0.0
        %v1566 = vadd.f32 %v1563, 0.0
        %1567 = vset.pattern.permute.xlu0 12
        %1568 = vperm.xlu0 %1567, %v677
        %v1569 = vpop.permute.xlu0 %1568
        %v1571 = vmul.f32 %v1569, %v673
        %v1572 = vmul.f32 %v1569, %v669
        %v1573 = vmul.f32 %v1569, %v674
        %1577 = vrot.lane.b32.xlu0 %v1571, 112
        %v1578 = vpop.permute.xlu0 %1577
        %1579 = vrot.lane.b32.xlu0 %v1572, 112
        %v1580 = vpop.permute.xlu0 %1579
        %1581 = vrot.lane.b32.xlu0 %v1573, 112
        %v1582 = vpop.permute.xlu0 %1581
        %v1583 = vsel %vm703, %v1578, %v1580
        %v1584 = vsel %vm703, %v1580, %v1582
        %v1588 = vadd.f32 %v1564, %v1583
        %v1589 = vadd.f32 %v1565, %v1584
        %v1590 = vadd.f32 %v1566, %v1582
        %1591 = vset.pattern.permute.xlu0 19
        %1592 = vperm.xlu0 %1591, %v677
        %v1593 = vpop.permute.xlu0 %1592
        %v1595 = vmul.f32 %v1593, %v673
        %v1596 = vmul.f32 %v1593, %v669
        %v1597 = vmul.f32 %v1593, %v674
        %1601 = vrot.lane.b32.xlu0 %v1595, 96
        %v1602 = vpop.permute.xlu0 %1601
        %1603 = vrot.lane.b32.xlu0 %v1596, 96
        %v1604 = vpop.permute.xlu0 %1603
        %1605 = vrot.lane.b32.xlu0 %v1597, 96
        %v1606 = vpop.permute.xlu0 %1605
        %v1607 = vsel %vm726, %v1602, %v1604
        %v1608 = vsel %vm726, %v1604, %v1606
        %v1612 = vadd.f32 %v1588, %v1607
        %v1613 = vadd.f32 %v1589, %v1608
        %v1614 = vadd.f32 %v1590, %v1606
        %1615 = vset.pattern.permute.xlu0 26
        %1616 = vperm.xlu0 %1615, %v677
        %v1617 = vpop.permute.xlu0 %1616
        %v1619 = vmul.f32 %v1617, %v673
        %v1620 = vmul.f32 %v1617, %v669
        %v1621 = vmul.f32 %v1617, %v674
        %1625 = vrot.lane.b32.xlu0 %v1619, 80
        %v1626 = vpop.permute.xlu0 %1625
        %1627 = vrot.lane.b32.xlu0 %v1620, 80
        %v1628 = vpop.permute.xlu0 %1627
        %1629 = vrot.lane.b32.xlu0 %v1621, 80
        %v1630 = vpop.permute.xlu0 %1629
        %v1631 = vsel %vm749, %v1626, %v1628
        %v1632 = vsel %vm749, %v1628, %v1630
        %v1636 = vadd.f32 %v1612, %v1631
        %v1637 = vadd.f32 %v1613, %v1632
        %v1638 = vadd.f32 %v1614, %v1630
        %1639 = vset.pattern.permute.xlu0 33
        %1640 = vperm.xlu0 %1639, %v677
        %v1641 = vpop.permute.xlu0 %1640
        %v1643 = vmul.f32 %v1641, %v673
        %v1644 = vmul.f32 %v1641, %v669
        %v1645 = vmul.f32 %v1641, %v674
        %1649 = vrot.lane.b32.xlu0 %v1643, 64
        %v1650 = vpop.permute.xlu0 %1649
        %1651 = vrot.lane.b32.xlu0 %v1644, 64
        %v1652 = vpop.permute.xlu0 %1651
        %1653 = vrot.lane.b32.xlu0 %v1645, 64
        %v1654 = vpop.permute.xlu0 %1653
        %v1655 = vsel %vm772, %v1650, %v1652
        %v1656 = vsel %vm772, %v1652, %v1654
        %v1660 = vadd.f32 %v1636, %v1655
        %v1661 = vadd.f32 %v1637, %v1656
        %v1662 = vadd.f32 %v1638, %v1654
        %1663 = vset.pattern.permute.xlu0 40
        %1664 = vperm.xlu0 %1663, %v677
        %v1665 = vpop.permute.xlu0 %1664
        %v1667 = vmul.f32 %v1665, %v673
        %v1668 = vmul.f32 %v1665, %v669
        %v1669 = vmul.f32 %v1665, %v674
        %1673 = vrot.lane.b32.xlu0 %v1667, 48
        %v1674 = vpop.permute.xlu0 %1673
        %1675 = vrot.lane.b32.xlu0 %v1668, 48
        %v1676 = vpop.permute.xlu0 %1675
        %1677 = vrot.lane.b32.xlu0 %v1669, 48
        %v1678 = vpop.permute.xlu0 %1677
        %v1679 = vsel %vm795, %v1674, %v1676
        %v1680 = vsel %vm795, %v1676, %v1678
        %v1684 = vadd.f32 %v1660, %v1679
        %v1685 = vadd.f32 %v1661, %v1680
        %v1686 = vadd.f32 %v1662, %v1678
        %1687 = vset.pattern.permute.xlu0 47
        %1688 = vperm.xlu0 %1687, %v677
        %v1689 = vpop.permute.xlu0 %1688
        %v1691 = vmul.f32 %v1689, %v673
        %v1692 = vmul.f32 %v1689, %v669
        %v1693 = vmul.f32 %v1689, %v674
        %1697 = vrot.lane.b32.xlu0 %v1691, 32
        %v1698 = vpop.permute.xlu0 %1697
        %1699 = vrot.lane.b32.xlu0 %v1692, 32
        %v1700 = vpop.permute.xlu0 %1699
        %1701 = vrot.lane.b32.xlu0 %v1693, 32
        %v1702 = vpop.permute.xlu0 %1701
        %v1703 = vsel %vm818, %v1698, %v1700
        %v1704 = vsel %vm818, %v1700, %v1702
        %v1708 = vadd.f32 %v1684, %v1703
        %v1709 = vadd.f32 %v1685, %v1704
        %v1710 = vadd.f32 %v1686, %v1702
        %v1711 = vlaneseq
        %v1712 = vshrl.u32 %v1711, 7
        %v1713 = vsub.s32 5, %v1712
        %v1714 = vrot.slane %v675, %v1713
        %v1715 = vlaneseq
        %v1716 = vshrl.u32 %v1715, 7
        %v1717 = vsub.s32 5, %v1716
        %v1718 = vrot.slane %v676, %v1717
        %1722 = vrot.lane.b32.xlu0 %v1708, 123
        %v1723 = vpop.permute.xlu0 %1722
        %1724 = vrot.lane.b32.xlu0 %v1709, 123
        %v1725 = vpop.permute.xlu0 %1724
        %1726 = vrot.lane.b32.xlu0 %v1710, 123
        %v1727 = vpop.permute.xlu0 %1726
        %vm1728 = vcmask 1006592
        %v1729 = vsel %vm1728, %v1723, %v1725
        %v1730 = vsel %vm1728, %v1725, %v1727
        %v1733 = vmul.f32 %v1714, %v1729
        %v1734 = vmul.f32 %v1718, %v1730
        %v1735 = vadd.f32 %v1555, %v1733
        %v1736 = vadd.f32 %v1556, %v1734
        %1737 = vset.pattern.permute.xlu0 6
        %1738 = vperm.xlu0 %1737, %v677
        %v1739 = vpop.permute.xlu0 %1738
        %v1741 = vmul.f32 %v1739, %v673
        %v1742 = vmul.f32 %v1739, %v669
        %v1743 = vmul.f32 %v1739, %v674
        %v1744 = vadd.f32 %v1741, 0.0
        %v1745 = vadd.f32 %v1742, 0.0
        %v1746 = vadd.f32 %v1743, 0.0
        %1747 = vset.pattern.permute.xlu0 13
        %1748 = vperm.xlu0 %1747, %v677
        %v1749 = vpop.permute.xlu0 %1748
        %v1751 = vmul.f32 %v1749, %v673
        %v1752 = vmul.f32 %v1749, %v669
        %v1753 = vmul.f32 %v1749, %v674
        %1757 = vrot.lane.b32.xlu0 %v1751, 112
        %v1758 = vpop.permute.xlu0 %1757
        %1759 = vrot.lane.b32.xlu0 %v1752, 112
        %v1760 = vpop.permute.xlu0 %1759
        %1761 = vrot.lane.b32.xlu0 %v1753, 112
        %v1762 = vpop.permute.xlu0 %1761
        %v1763 = vsel %vm703, %v1758, %v1760
        %v1764 = vsel %vm703, %v1760, %v1762
        %v1768 = vadd.f32 %v1744, %v1763
        %v1769 = vadd.f32 %v1745, %v1764
        %v1770 = vadd.f32 %v1746, %v1762
        %1771 = vset.pattern.permute.xlu0 20
        %1772 = vperm.xlu0 %1771, %v677
        %v1773 = vpop.permute.xlu0 %1772
        %v1775 = vmul.f32 %v1773, %v673
        %v1776 = vmul.f32 %v1773, %v669
        %v1777 = vmul.f32 %v1773, %v674
        %1781 = vrot.lane.b32.xlu0 %v1775, 96
        %v1782 = vpop.permute.xlu0 %1781
        %1783 = vrot.lane.b32.xlu0 %v1776, 96
        %v1784 = vpop.permute.xlu0 %1783
        %1785 = vrot.lane.b32.xlu0 %v1777, 96
        %v1786 = vpop.permute.xlu0 %1785
        %v1787 = vsel %vm726, %v1782, %v1784
        %v1788 = vsel %vm726, %v1784, %v1786
        %v1792 = vadd.f32 %v1768, %v1787
        %v1793 = vadd.f32 %v1769, %v1788
        %v1794 = vadd.f32 %v1770, %v1786
        %1795 = vset.pattern.permute.xlu0 27
        %1796 = vperm.xlu0 %1795, %v677
        %v1797 = vpop.permute.xlu0 %1796
        %v1799 = vmul.f32 %v1797, %v673
        %v1800 = vmul.f32 %v1797, %v669
        %v1801 = vmul.f32 %v1797, %v674
        %1805 = vrot.lane.b32.xlu0 %v1799, 80
        %v1806 = vpop.permute.xlu0 %1805
        %1807 = vrot.lane.b32.xlu0 %v1800, 80
        %v1808 = vpop.permute.xlu0 %1807
        %1809 = vrot.lane.b32.xlu0 %v1801, 80
        %v1810 = vpop.permute.xlu0 %1809
        %v1811 = vsel %vm749, %v1806, %v1808
        %v1812 = vsel %vm749, %v1808, %v1810
        %v1816 = vadd.f32 %v1792, %v1811
        %v1817 = vadd.f32 %v1793, %v1812
        %v1818 = vadd.f32 %v1794, %v1810
        %1819 = vset.pattern.permute.xlu0 34
        %1820 = vperm.xlu0 %1819, %v677
        %v1821 = vpop.permute.xlu0 %1820
        %v1823 = vmul.f32 %v1821, %v673
        %v1824 = vmul.f32 %v1821, %v669
        %v1825 = vmul.f32 %v1821, %v674
        %1829 = vrot.lane.b32.xlu0 %v1823, 64
        %v1830 = vpop.permute.xlu0 %1829
        %1831 = vrot.lane.b32.xlu0 %v1824, 64
        %v1832 = vpop.permute.xlu0 %1831
        %1833 = vrot.lane.b32.xlu0 %v1825, 64
        %v1834 = vpop.permute.xlu0 %1833
        %v1835 = vsel %vm772, %v1830, %v1832
        %v1836 = vsel %vm772, %v1832, %v1834
        %v1840 = vadd.f32 %v1816, %v1835
        %v1841 = vadd.f32 %v1817, %v1836
        %v1842 = vadd.f32 %v1818, %v1834
        %1843 = vset.pattern.permute.xlu0 41
        %1844 = vperm.xlu0 %1843, %v677
        %v1845 = vpop.permute.xlu0 %1844
        %v1847 = vmul.f32 %v1845, %v673
        %v1848 = vmul.f32 %v1845, %v669
        %v1849 = vmul.f32 %v1845, %v674
        %1853 = vrot.lane.b32.xlu0 %v1847, 48
        %v1854 = vpop.permute.xlu0 %1853
        %1855 = vrot.lane.b32.xlu0 %v1848, 48
        %v1856 = vpop.permute.xlu0 %1855
        %1857 = vrot.lane.b32.xlu0 %v1849, 48
        %v1858 = vpop.permute.xlu0 %1857
        %v1859 = vsel %vm795, %v1854, %v1856
        %v1860 = vsel %vm795, %v1856, %v1858
        %v1864 = vadd.f32 %v1840, %v1859
        %v1865 = vadd.f32 %v1841, %v1860
        %v1866 = vadd.f32 %v1842, %v1858
        %1867 = vset.pattern.permute.xlu0 48
        %1868 = vperm.xlu0 %1867, %v677
        %v1869 = vpop.permute.xlu0 %1868
        %v1871 = vmul.f32 %v1869, %v673
        %v1872 = vmul.f32 %v1869, %v669
        %v1873 = vmul.f32 %v1869, %v674
        %1877 = vrot.lane.b32.xlu0 %v1871, 32
        %v1878 = vpop.permute.xlu0 %1877
        %1879 = vrot.lane.b32.xlu0 %v1872, 32
        %v1880 = vpop.permute.xlu0 %1879
        %1881 = vrot.lane.b32.xlu0 %v1873, 32
        %v1882 = vpop.permute.xlu0 %1881
        %v1883 = vsel %vm818, %v1878, %v1880
        %v1884 = vsel %vm818, %v1880, %v1882
        %v1888 = vadd.f32 %v1864, %v1883
        %v1889 = vadd.f32 %v1865, %v1884
        %v1890 = vadd.f32 %v1866, %v1882
        %v1891 = vlaneseq
        %v1892 = vshrl.u32 %v1891, 7
        %v1893 = vsub.s32 6, %v1892
        %v1894 = vrot.slane %v675, %v1893
        %v1895 = vlaneseq
        %v1896 = vshrl.u32 %v1895, 7
        %v1897 = vsub.s32 6, %v1896
        %v1898 = vrot.slane %v676, %v1897
        %1902 = vrot.lane.b32.xlu0 %v1888, 122
        %v1903 = vpop.permute.xlu0 %1902
        %1904 = vrot.lane.b32.xlu0 %v1889, 122
        %v1905 = vpop.permute.xlu0 %1904
        %1906 = vrot.lane.b32.xlu0 %v1890, 122
        %v1907 = vpop.permute.xlu0 %1906
        %vm1908 = vcmask 998400
        %v1909 = vsel %vm1908, %v1903, %v1905
        %v1910 = vsel %vm1908, %v1905, %v1907
        %v1913 = vmul.f32 %v1894, %v1909
        %v1914 = vmul.f32 %v1898, %v1910
        %v1915 = vadd.f32 %v1735, %v1913
        %v1916 = vadd.f32 %v1736, %v1914
        %v1919 = vrot.slane %v1915, 1
        %v1920 = vrot.slane %v1916, 1
        %v1923 = vadd.f32 %v1915, %v1919
        %v1924 = vadd.f32 %v1916, %v1920
        %s1925 = sld [smem:[#allocation2]]
        %v1926 = vstv %s1925
        %v1927 = vadd.f32 %v1923, %v1926
        %v1928 = vadd.f32 %v1924, %v1926
        %v1929 = vxor.u32 %v1927, 2147483648
        %v1930 = vxor.u32 %v1928, 2147483648
        %v1931 = vmul.f32 %v1929, 1.442695
        %v1932 = vpow.pop %v1931
        %v1933 = vmul.f32 %v1930, 1.442695
        %v1934 = vpow.pop %v1933
        %v1935 = vadd.f32 %v1932, 1.0
        %v1936 = vadd.f32 %v1934, 1.0
        %v1937 = vrcp.pop %v1935
        %v1938 = vmul.f32 1.0, %v1937
        %v1939 = vrcp.pop %v1936
        %v1940 = vmul.f32 1.0, %v1939
        %v1941 = vlaneseq
        %v1942 = vshrl.u32 %v1941, 7
        %v1943 = vsub.s32 0, %v1942
        %v1944 = vrot.slane %v1938, %v1943
        %v1945 = vlaneseq
        %v1946 = vshrl.u32 %v1945, 7
        %v1947 = vsub.s32 0, %v1946
        %v1948 = vrot.slane %v1940, %v1947
        %v1949 = vmul.f32 %v612, %v1944
        %v1950 = vmul.f32 %v613, %v1948
        %v1951 = vmul.f32 %v614, %v1944
        %v1952 = vmul.f32 %v615, %v1948
        %v1953 = vmul.f32 %v616, %v1944
        %v1954 = vmul.f32 %v617, %v1948
        %v1955 = vmul.f32 %v618, %v1944
        %v1956 = vmul.f32 %v619, %v1948
        %1957 = vst [vmem:[%s338] sm:$0xff] %v1949
        %1958 = vst [vmem:[%s338 + $0x8] sm:$0xff] %v1950
        %1959 = vst [vmem:[%s338 + $0x10] sm:$0xff] %v1951
        %1960 = vst [vmem:[%s338 + $0x18] sm:$0xff] %v1952
        %1961 = vst [vmem:[%s338 + $0x20] sm:$0xff] %v1953
        %1962 = vst [vmem:[%s338 + $0x28] sm:$0xff] %v1954
        %1963 = vst [vmem:[%s338 + $0x30] sm:$0xff] %v1955
        %1964 = vst [vmem:[%s338 + $0x38] sm:$0xff] %v1956
        %s1965 = sand.u32 %s208, 1
        %s1966 = scalar_lea.sflag [#allocation5], %s1965
        %s1967 = sand.u32 %s208, 1
        %s1968 = smul.addr %s1967, 64
        %s1969 = scalar_lea.vmem [#allocation8], %s1968
        // Predicated region
        $region61: #{tpu_custom_call.1} parent=51 // pred_check
          %p1970 = pneg %p218
        $region62: #{tpu_custom_call.1} parent=51 // pred_check_branch
          %1972 = sbr.rel (%p1970) target = $region64
        $region63: #{tpu_custom_call.1} parent=51 // pred_region
          %s1974 = ssub.s32 1024, 1024
          %1975 = vsyncadd %s1966, %s1974
          %s1976 = smul.addr %s27, 8
          %s1977 = smul.addr %s1976, 128
          %s1978 = scalar_lea.hbm %s8, %s1977
          %s1979 = sshll.u32 %s1969, 4
          %s1980 = int_to_ptr.vmem [resolvable:$true] %s1979
          %1985 = dma.vmem_to_hbm [thread:$0]  %s1980, 1024, %s1978, %s1966, 256, 256, 16
        $region64: #{tpu_custom_call.1} parent=51 // pred_fallthru
          _
      $region52: #{tpu_custom_call.1} parent=5 // pred_fallthru
        _
      %p1986 = scmp.le.s32.totalorder 2, %s22
      // Predicated region
      $region65: #{tpu_custom_call.1} parent=5 // pred_check
        %p1987 = pneg %p1986
      $region66: #{tpu_custom_call.1} parent=5 // pred_check_branch
        %1989 = sbr.rel (%p1987) target = $region68
      $region67: #{tpu_custom_call.1} parent=5 // pred_region
        %s1990 = ssub.s32 %s22, 2
        // Predicated region
        $region69: #{tpu_custom_call.1} parent=67 // pred_check
          %p1991 = pneg %p224
        $region70: #{tpu_custom_call.1} parent=67 // pred_check_branch
          %1993 = sbr.rel (%p1991) target = $region72
        $region71: #{tpu_custom_call.1} parent=67 // pred_region
          %s1994 = sand.u32 %s209, 1
          %s1995 = scalar_lea.sflag [#allocation5], %s1994
          %s1996 = sand.u32 %s209, 1
          %s1997 = smul.addr %s1996, 64
          %s1998 = scalar_lea.vmem [#allocation8], %s1997
          %1999 = dma.done %s1995, 1024
        $region72: #{tpu_custom_call.1} parent=67 // pred_fallthru
          _
      $region68: #{tpu_custom_call.1} parent=5 // pred_fallthru
        _
    $region6: #{tpu_custom_call.1} parent=1 // loop_footer
      %s26 = sadd.s32 1, %s22
    $region7: #{tpu_custom_call.1} parent=1 // loop_footer_branch
      %21 = sbr.rel target = $region3
    $region8: #{tpu_custom_call.1} parent=1 // loop_exit
      _
    %2000 = vsyncpa [#allocation4], 1
    %s2001 = scalar_lea.sflag [#allocation4], 1
    %2002 = vsyncpa %s2001, 1
    %2003 = vsyncpa [#allocation5], 1
    %s2004 = scalar_lea.sflag [#allocation5], 1
    %2005 = vsyncpa %s2004, 1
    %2006 = vsyncpa [#allocation6], 1
    %s2007 = scalar_lea.sflag [#allocation6], 1
    %2008 = vsyncpa %s2007, 1

</llo_original>
